<compile_context>
chip_gen: v7x
topology: tpu7x:2x2x1
jax: 0.10.0
libtpu: 0.0.40
codegen_flags: <defaults>
</compile_context>

<pallas_src>
import functools

import jax
import jax.numpy as jnp
from jax.experimental import pallas as pl
from jax.experimental.pallas import tpu as pltpu


def _round_up(x, m):
    return ((x + m - 1) // m) * m


def _pick_tile(desired, total):
    """Largest multiple of 128 <= desired that divides `total` (total % 128 == 0)."""
    t = min(_round_up(desired, 128), total)
    t = (t // 128) * 128
    while total % t:
        t -= 128
    return t


def _choose_tm(M, n_ct, cap):
    """Row tile: minimize M-padding waste; keep >=2 parallel grid points for v7x."""
    if M < 128:
        return _round_up(max(M, 8), 8)
    cands = [c for c in (1024, 768, 512, 384, 256, 128) if c <= cap]
    tm = min(cands, key=lambda t: (_round_up(M, t) - M, -t))
    if (_round_up(M, tm) // tm) * n_ct < 2:
        split = [t for t in cands if t < tm and _round_up(M, t) // t >= 2]
        if split:
            tm = min(split, key=lambda t: (_round_up(M, t) - M, -t))
    return tm


def _conv_mm_kernel(a_ref, w_ref, o_ref, psum_ref, psq_ref, acc_ref):
    """im2col matmul with K as an 'arbitrary' reduction axis.

    Accumulates in a f32 VMEM scratch (no HBM accumulator round trip), writes the
    bf16 conv output once at the last K step, and emits per-row-tile partial channel
    sums / sums-of-squares (8 sublane partials) for BatchNorm statistics.
    """
    k = pl.program_id(2)
    p = jnp.dot(a_ref[...], w_ref[...], preferred_element_type=jnp.float32)

    @pl.when(k == 0)
    def _():
        acc_ref[...] = p

    @pl.when(k != 0)
    def _():
        acc_ref[...] += p

    @pl.when(k == pl.num_programs(2) - 1)
    def _():
        y = acc_ref[...]
        o_ref[...] = y.astype(o_ref.dtype)
        tm, tc = y.shape
        yg = y.reshape(tm // 8, 8, tc)          # sublane-group partials (VPU adds only)
        psum_ref[...] = jnp.sum(yg, axis=0)     # (8, tc)
        psq_ref[...] = jnp.sum(yg * yg, axis=0)


def _bn_relu_kernel(y_ref, scale_ref, shift_ref, o_ref):
    """Fused affine BatchNorm (pre-folded scale/shift) + ReLU, bf16 in place."""
    y = y_ref[...].astype(jnp.float32)
    o_ref[...] = jnp.maximum(y * scale_ref[...] + shift_ref[...], 0.0).astype(o_ref.dtype)


@functools.partial(
    jax.jit,
    static_argnames=("stride", "padding", "batch_norm", "pool", "eps",
                     "tm", "tc", "tk", "compute_dtype"))
def conv_block_forward(x, weight, bias, gamma, beta, *,
                       stride=1, padding=True, batch_norm=True, pool=False,
                       eps=1e-5, tm=1024, tc=512, tk=1024,
                       compute_dtype=jnp.bfloat16):
    """Forward pass of ConvBlock.

    x:      [N, C_in, H, W]          (NCHW, float32)
    weight: [C_out, C_in, kH, kW]    (torch OIHW layout)
    bias:   [C_out]                  (cancels exactly under training-mode BN)
    gamma, beta: [C_out]             BatchNorm affine params
    """
    f32 = jnp.float32
    cd = compute_dtype
    N, C_in, H, W = x.shape
    C_out, _, kh, kw = weight.shape
    pad = 1 if padding else 0        # faithful to the torch module (pad_cond = 1 if padding)
    OH = (H + 2 * pad - kh) // stride + 1
    OW = (W + 2 * pad - kw) // stride + 1
    M = N * OH * OW
    K = C_in * kh * kw

    # ---- lane-dense geometry: K and C_out zero-padded to multiples of 128 ----
    Cp = _round_up(C_out, 128)
    Kp = _round_up(K, 128)
    tc_ = Cp if Cp <= 1024 else _pick_tile(tc, Cp)   # single channel tile -> A streamed once
    tk_ = _pick_tile(tk, Kp)
    n_ct = Cp // tc_
    tm_ = _choose_tm(M, n_ct, tm)
    Mp = _round_up(M, tm_)
    n_mt = Mp // tm_
    n_kt = Kp // tk_

    # ---- im2col in bf16, NHWC tap order (halves every XLA-side pass over A) ----
    # TODO(synk): fuse im2col into kernel 1 (read padded NHWC input per tap in-kernel)
    # so the kh*kw-times-larger A matrix never hits HBM at all.
    xh = jnp.transpose(x, (0, 2, 3, 1)).astype(cd)                   # NHWC bf16
    xh = jnp.pad(xh, ((0, 0), (pad, pad), (pad, pad), (0, 0)))
    taps = [xh[:, dh:dh + stride * OH:stride, dw:dw + stride * OW:stride, :]
            for dh in range(kh) for dw in range(kw)]                 # kh*kw x [N,OH,OW,Cin]
    A = jnp.stack(taps, axis=3).reshape(M, K)                        # K order = (kh, kw, Cin)
    A = jnp.pad(A, ((0, Mp - M), (0, Kp - K)))
    Wm = jnp.transpose(weight, (2, 3, 1, 0)).reshape(K, C_out).astype(cd)
    Wm = jnp.pad(Wm, ((0, Kp - K), (0, Cp - C_out)))

    vmem_limit = 48 * 1024 * 1024   # working set capped well below; safe on v7x 64 MiB VMEM

    # ---- Pallas kernel 1: conv-as-matmul + per-tile batch-stat partials ----
    conv_raw, psum, psq = pl.pallas_call(
        _conv_mm_kernel,
        out_shape=(jax.ShapeDtypeStruct((Mp, Cp), cd),
                   jax.ShapeDtypeStruct((n_mt * 8, Cp), f32),
                   jax.ShapeDtypeStruct((n_mt * 8, Cp), f32)),
        grid_spec=pltpu.PrefetchScalarGridSpec(
            num_scalar_prefetch=0,
            grid=(n_mt, n_ct, n_kt),
            in_specs=[pl.BlockSpec((tm_, tk_), lambda i, j, k: (i, k)),
                      pl.BlockSpec((tk_, tc_), lambda i, j, k: (k, j))],
            out_specs=(pl.BlockSpec((tm_, tc_), lambda i, j, k: (i, j)),
                       pl.BlockSpec((8, tc_), lambda i, j, k: (i, j)),
                       pl.BlockSpec((8, tc_), lambda i, j, k: (i, j))),
            scratch_shapes=[pltpu.VMEM((tm_, tc_), f32)]),
        compiler_params=pltpu.CompilerParams(
            dimension_semantics=("parallel", "parallel", "arbitrary"),
            vmem_limit_bytes=vmem_limit),
    )(A, Wm)

    # ---- fold training-mode BatchNorm (biased batch variance) into per-channel affine ----
    if batch_norm:
        # NOTE: E[x^2]-E[x]^2 in f32 can cancel for |mean| >> std at very large M;
        # clamped at 0 and computed from the f32 (pre-bf16) accumulator partials.
        ssum = jnp.sum(psum, axis=0)             # padded rows/cols contribute exactly 0
        ssq = jnp.sum(psq, axis=0)
        mean = ssum / M
        var = jnp.maximum(ssq / M - mean * mean, 0.0)
        gp = jnp.pad(gamma.astype(f32), (0, Cp - C_out))
        bp = jnp.pad(beta.astype(f32), (0, Cp - C_out))
        scale = gp / jnp.sqrt(var + eps)
        shift = bp - mean * scale                # conv bias cancels under batch stats
    else:
        scale = jnp.ones((Cp,), f32)
        shift = jnp.pad(bias.astype(f32), (0, Cp - C_out))

    # ---- Pallas kernel 2: fused BN affine + ReLU, bf16 in place (aliased) ----
    y = pl.pallas_call(
        _bn_relu_kernel,
        out_shape=jax.ShapeDtypeStruct((Mp, Cp), cd),
        grid_spec=pltpu.PrefetchScalarGridSpec(
            num_scalar_prefetch=0,
            grid=(n_mt, n_ct),
            in_specs=[pl.BlockSpec((tm_, tc_), lambda i, j: (i, j)),
                      pl.BlockSpec((1, tc_), lambda i, j: (0, j)),
                      pl.BlockSpec((1, tc_), lambda i, j: (0, j))],
            out_specs=pl.BlockSpec((tm_, tc_), lambda i, j: (i, j))),
        compiler_params=pltpu.CompilerParams(
            dimension_semantics=("parallel", "parallel"),
            vmem_limit_bytes=vmem_limit),
        input_output_aliases={0: 0},
    )(conv_raw, scale.reshape(1, Cp), shift.reshape(1, Cp))

    # Back to NCHW f32: one fused XLA slice + transpose + upcast copy.
    out = (y[:M, :C_out]
           .reshape(N, OH, OW, C_out)
           .transpose(0, 3, 1, 2)
           .astype(f32))

    if pool:
        # nn.MaxPool2d(kernel_size=2): plain-JAX fallback (not a Pallas kernel).
        out = jax.lax.reduce_window(out, -jnp.inf, jax.lax.max,
                                    (1, 1, 2, 2), (1, 1, 2, 2), "VALID")
    return out


if __name__ == "__main__":
    key = jax.random.PRNGKey(0)
    kx, kw_, kb, kg, kbt = jax.random.split(key, 5)

    N, C_in, H, W = 2, 4, 16, 16
    C_out, k_size = 8, 3

    x = jax.random.normal(kx, (N, C_in, H, W), dtype=jnp.float32)
    weight = jax.random.normal(kw_, (C_out, C_in, k_size, k_size), dtype=jnp.float32) * 0.1
    bias = jax.random.normal(kb, (C_out,), dtype=jnp.float32) * 0.1
    gamma = 1.0 + 0.1 * jax.random.normal(kg, (C_out,), dtype=jnp.float32)
    beta = 0.1 * jax.random.normal(kbt, (C_out,), dtype=jnp.float32)

    out = conv_block_forward(x, weight, bias, gamma, beta)
    out = jax.block_until_ready(out)

    # Reference (plain JAX, f32). Conv bias is included here; training-mode BN
    # cancels it exactly, which is why the Pallas path drops it.
    ref = jax.lax.conv_general_dilated(
        x, weight, window_strides=(1, 1), padding=((1, 1), (1, 1)),
        dimension_numbers=("NCHW", "OIHW", "NCHW")) + bias.reshape(1, -1, 1, 1)
    mean = ref.mean(axis=(0, 2, 3))
    var = ref.var(axis=(0, 2, 3))
    ref_bn = (gamma.reshape(1, -1, 1, 1) * (ref - mean.reshape(1, -1, 1, 1))
              / jnp.sqrt(var.reshape(1, -1, 1, 1) + 1e-5) + beta.reshape(1, -1, 1, 1))
    ref_out = jnp.maximum(ref_bn, 0.0)

    assert out.shape == (N, C_out, H, W)
    max_err = jnp.max(jnp.abs(out - ref_out))
    # bf16 MXU inputs + bf16 intermediate (f32 accumulation) -> allow a few % deviation.
    assert jnp.allclose(out, ref_out, atol=5e-2, rtol=5e-2), \
        f"mismatch vs reference, max err {max_err}"
    print("KERNEL_OK")
</pallas_src>

<mosaic_0001>
module attributes {stable_mosaic.version = 11 : i64} {
  func.func @_conv_mm_kernel(%arg0: i32, %arg1: i32, %arg2: i32, %arg3: memref<256x128xbf16, #tpu.memory_space<vmem>>, %arg4: memref<128x128xbf16, #tpu.memory_space<vmem>>, %arg5: memref<256x128xbf16, #tpu.memory_space<vmem>>, %arg6: memref<8x128xf32, #tpu.memory_space<vmem>>, %arg7: memref<8x128xf32, #tpu.memory_space<vmem>>, %arg8: memref<256x128xf32, #tpu.memory_space<vmem>>) attributes {dimension_semantics = [#tpu.dimension_semantics<parallel>, #tpu.dimension_semantics<parallel>, #tpu.dimension_semantics<arbitrary>], iteration_bounds = array<i64: 2, 1, 1>, scalar_prefetch = 0 : i64, scratch_operands = 1 : i64, tpu.core_type = #tpu.core_type<tc>, window_params = [{transform_indices = @transform_0, window_bounds = array<i64: 256, 128>}, {transform_indices = @transform_1, window_bounds = array<i64: 128, 128>}, {transform_indices = @transform_2, window_bounds = array<i64: 256, 128>}, {transform_indices = @transform_3, window_bounds = array<i64: 8, 128>}, {transform_indices = @transform_4, window_bounds = array<i64: 8, 128>}]} {
    %c0 = arith.constant 0 : index
    %c0_0 = arith.constant 0 : index
    %0 = vector.load %arg3[%c0, %c0_0] : memref<256x128xbf16, #tpu.memory_space<vmem>>, vector<256x128xbf16>
    %c0_1 = arith.constant 0 : index
    %c0_2 = arith.constant 0 : index
    %1 = vector.load %arg4[%c0_1, %c0_2] : memref<128x128xbf16, #tpu.memory_space<vmem>>, vector<128x128xbf16>
    %cst = arith.constant dense<0.000000e+00> : vector<256x128xf32>
    %2 = tpu.matmul %0, %1, %cst {dimension_numbers = #tpu.dot_dimension_numbers<[1], [0], [0], [1], [0, 0, 1, 1], [], []>} : vector<256x128xbf16>, vector<128x128xbf16>, vector<256x128xf32> -> vector<256x128xf32>
    %c0_i32 = arith.constant 0 : i32
    %3 = arith.cmpi eq, %arg2, %c0_i32 : i32
    %4 = arith.extui %3 : i1 to i32
    %c0_i32_3 = arith.constant 0 : i32
    %5 = arith.cmpi ne, %4, %c0_i32_3 : i32
    scf.if %5 {
      %c0_8 = arith.constant 0 : index
      %c0_9 = arith.constant 0 : index
      %12 = vector.load %arg8[%c0_8, %c0_9] : memref<256x128xf32, #tpu.memory_space<vmem>>, vector<256x128xf32>
      tpu.vector_store %arg8[%c0_8, %c0_9], %2 {strides = array<i32>} : memref<256x128xf32, #tpu.memory_space<vmem>>, vector<256x128xf32>,
    } else {
    }
    %c0_i32_4 = arith.constant 0 : i32
    %6 = arith.cmpi ne, %arg2, %c0_i32_4 : i32
    %7 = arith.extui %6 : i1 to i32
    %c0_i32_5 = arith.constant 0 : i32
    %8 = arith.cmpi ne, %7, %c0_i32_5 : i32
    scf.if %8 {
      %c0_8 = arith.constant 0 : index
      %c0_9 = arith.constant 0 : index
      %12 = vector.load %arg8[%c0_8, %c0_9] : memref<256x128xf32, #tpu.memory_space<vmem>>, vector<256x128xf32>
      %13 = arith.addf %12, %2 : vector<256x128xf32>
      %c0_10 = arith.constant 0 : index
      %c0_11 = arith.constant 0 : index
      %14 = vector.load %arg8[%c0_10, %c0_11] : memref<256x128xf32, #tpu.memory_space<vmem>>, vector<256x128xf32>
      tpu.vector_store %arg8[%c0_10, %c0_11], %13 {strides = array<i32>} : memref<256x128xf32, #tpu.memory_space<vmem>>, vector<256x128xf32>,
    } else {
    }
    %c0_i32_6 = arith.constant 0 : i32
    %9 = arith.cmpi eq, %arg2, %c0_i32_6 : i32
    %10 = arith.extui %9 : i1 to i32
    %c0_i32_7 = arith.constant 0 : i32
    %11 = arith.cmpi ne, %10, %c0_i32_7 : i32
    scf.if %11 {
      %c0_8 = arith.constant 0 : index
      %c0_9 = arith.constant 0 : index
      %12 = vector.load %arg8[%c0_8, %c0_9] : memref<256x128xf32, #tpu.memory_space<vmem>>, vector<256x128xf32>
      %13 = arith.truncf %12 : vector<256x128xf32> to vector<256x128xbf16>
      %c0_10 = arith.constant 0 : index
      %c0_11 = arith.constant 0 : index
      %14 = vector.load %arg5[%c0_10, %c0_11] : memref<256x128xbf16, #tpu.memory_space<vmem>>, vector<256x128xbf16>
      tpu.vector_store %arg5[%c0_10, %c0_11], %13 {strides = array<i32>} : memref<256x128xbf16, #tpu.memory_space<vmem>>, vector<256x128xbf16>,
      %15 = vector.shape_cast %12 : vector<256x128xf32> to vector<32x8x128xf32>
      %cst_12 = arith.constant dense<0.000000e+00> : vector<8x128xf32>
      %16 = vector.multi_reduction <add>, %15, %cst_12 [0] : vector<32x8x128xf32> to vector<8x128xf32>
      %c0_13 = arith.constant 0 : index
      %c0_14 = arith.constant 0 : index
      %17 = vector.load %arg6[%c0_13, %c0_14] : memref<8x128xf32, #tpu.memory_space<vmem>>, vector<8x128xf32>
      tpu.vector_store %arg6[%c0_13, %c0_14], %16 {strides = array<i32>} : memref<8x128xf32, #tpu.memory_space<vmem>>, vector<8x128xf32>,
      %18 = arith.mulf %15, %15 : vector<32x8x128xf32>
      %cst_15 = arith.constant dense<0.000000e+00> : vector<8x128xf32>
      %19 = vector.multi_reduction <add>, %18, %cst_15 [0] : vector<32x8x128xf32> to vector<8x128xf32>
      %c0_16 = arith.constant 0 : index
      %c0_17 = arith.constant 0 : index
      %20 = vector.load %arg7[%c0_16, %c0_17] : memref<8x128xf32, #tpu.memory_space<vmem>>, vector<8x128xf32>
      tpu.vector_store %arg7[%c0_16, %c0_17], %19 {strides = array<i32>} : memref<8x128xf32, #tpu.memory_space<vmem>>, vector<8x128xf32>,
    } else {
    }
    return
  }
  func.func @transform_0(%arg0: i32, %arg1: i32, %arg2: i32) -> (i32, i32) {
    %c0_i32 = arith.constant 0 : i32
    return %arg0, %arg2 : i32, i32
  }
  func.func @transform_1(%arg0: i32, %arg1: i32, %arg2: i32) -> (i32, i32) {
    %c0_i32 = arith.constant 0 : i32
    return %arg2, %arg1 : i32, i32
  }
  func.func @transform_2(%arg0: i32, %arg1: i32, %arg2: i32) -> (i32, i32) {
    %c0_i32 = arith.constant 0 : i32
    return %arg0, %arg1 : i32, i32
  }
  func.func @transform_3(%arg0: i32, %arg1: i32, %arg2: i32) -> (i32, i32) {
    %c0_i32 = arith.constant 0 : i32
    return %arg0, %arg1 : i32, i32
  }
  func.func @transform_4(%arg0: i32, %arg1: i32, %arg2: i32) -> (i32, i32) {
    %c0_i32 = arith.constant 0 : i32
    return %arg0, %arg1 : i32, i32
  }
}

module attributes {stable_mosaic.version = 11 : i64} {
  func.func @_bn_relu_kernel(%arg0: i32, %arg1: i32, %arg2: memref<256x128xbf16, #tpu.memory_space<vmem>>, %arg3: memref<1x128xf32, #tpu.memory_space<vmem>>, %arg4: memref<1x128xf32, #tpu.memory_space<vmem>>, %arg5: memref<256x128xbf16, #tpu.memory_space<vmem>>) attributes {dimension_semantics = [#tpu.dimension_semantics<parallel>, #tpu.dimension_semantics<parallel>], iteration_bounds = array<i64: 2, 1>, scalar_prefetch = 0 : i64, scratch_operands = 0 : i64, tpu.core_type = #tpu.core_type<tc>, window_params = [{transform_indices = @transform_0, window_bounds = array<i64: 256, 128>}, {transform_indices = @transform_1, window_bounds = array<i64: 1, 128>}, {transform_indices = @transform_2, window_bounds = array<i64: 1, 128>}, {transform_indices = @transform_3, window_bounds = array<i64: 256, 128>}]} {
    %c0 = arith.constant 0 : index
    %c0_0 = arith.constant 0 : index
    %0 = vector.load %arg2[%c0, %c0_0] : memref<256x128xbf16, #tpu.memory_space<vmem>>, vector<256x128xbf16>
    %1 = arith.extf %0 : vector<256x128xbf16> to vector<256x128xf32>
    %c0_1 = arith.constant 0 : index
    %c0_2 = arith.constant 0 : index
    %2 = vector.load %arg3[%c0_1, %c0_2] : memref<1x128xf32, #tpu.memory_space<vmem>>, vector<1x128xf32>
    %3 = vector.broadcast %2 : vector<1x128xf32> to vector<256x128xf32>
    %4 = arith.mulf %1, %3 : vector<256x128xf32>
    %c0_3 = arith.constant 0 : index
    %c0_4 = arith.constant 0 : index
    %5 = vector.load %arg4[%c0_3, %c0_4] : memref<1x128xf32, #tpu.memory_space<vmem>>, vector<1x128xf32>
    %6 = vector.broadcast %5 : vector<1x128xf32> to vector<256x128xf32>
    %7 = arith.addf %4, %6 : vector<256x128xf32>
    %cst = arith.constant 0.000000e+00 : f32
    %8 = vector.broadcast %cst : f32 to vector<256x128xf32>
    %9 = arith.maximumf %7, %8 : vector<256x128xf32>
    %10 = arith.truncf %9 : vector<256x128xf32> to vector<256x128xbf16>
    %c0_5 = arith.constant 0 : index
    %c0_6 = arith.constant 0 : index
    %11 = vector.load %arg5[%c0_5, %c0_6] : memref<256x128xbf16, #tpu.memory_space<vmem>>, vector<256x128xbf16>
    tpu.vector_store %arg5[%c0_5, %c0_6], %10 {strides = array<i32>} : memref<256x128xbf16, #tpu.memory_space<vmem>>, vector<256x128xbf16>,
    return
  }
  func.func @transform_0(%arg0: i32, %arg1: i32) -> (i32, i32) {
    %c0_i32 = arith.constant 0 : i32
    return %arg0, %arg1 : i32, i32
  }
  func.func @transform_1(%arg0: i32, %arg1: i32) -> (i32, i32) {
    %c0_i32 = arith.constant 0 : i32
    %c0_i32_0 = arith.constant 0 : i32
    return %c0_i32, %arg1 : i32, i32
  }
  func.func @transform_2(%arg0: i32, %arg1: i32) -> (i32, i32) {
    %c0_i32 = arith.constant 0 : i32
    %c0_i32_0 = arith.constant 0 : i32
    return %c0_i32, %arg1 : i32, i32
  }
  func.func @transform_3(%arg0: i32, %arg1: i32) -> (i32, i32) {
    %c0_i32 = arith.constant 0 : i32
    return %arg0, %arg1 : i32, i32
  }
}

</mosaic_0001>

<llo_original>
// kernel: conv_block_forward.3
$region0: #{conv_block_forward.3}
  #allocation0 [shape = 'u32[]', space=smem, size = 0x4, offset = 0x4, fixed_abs, tag = 'smem constant byte address 0x4 - core index']
  #allocation1 [shape = 'u32[144,128]{1,0:T(1,128)}', space=vmem, size = 0x12000, scoped, tag = 'internal scratch']
  %s0 = inlined_call_operand.vmem [shape: bf16[512,128], index: 0, kind: input, shape index: {}, may-alias: {0,3}]
  %s1 = inlined_call_operand.vmem [shape: f32[1,128], index: 1, kind: input, shape index: {}]
  %s2 = inlined_call_operand.vmem [shape: f32[1,128], index: 2, kind: input, shape index: {}]
  %s3 = inlined_call_operand.vmem [shape: bf16[512,128], index: 3, kind: output, shape index: {}, may-alias: {0,3}]
  %s4 = sld [smem:[#allocation0]]
  $region45: #{conv_block_forward.3} parent=0
    _
  %s6 = ssub.s32 1, %s4
  %s7 = scalar_select 0, %s6, %s4
  loop: start=0, step=1, limit=4
  $region2: #{conv_block_forward.3} parent=0 // loop_pre_header
    _
  $region3: #{conv_block_forward.3} parent=0 // loop_header
    %s9 = sphi 0, %s13
    %p10 = scmp.ge.s32.totalorder %s9, 4
    %s16 = sphi 0, %s28
    %s17 = sphi 0, %s24
    %s18 = sphi 0, %s16
    %s19 = sphi 0, %s17
    %s20 = sphi 0, %s18
    %s21 = sphi 0, %s19
    %s33 = sphi 0, %s35
    %s36 = sphi 0, %s33
    %s37 = sphi 0, %s36
    %s53 = sphi 0, %s37
    %s59 = sphi 0, %s61
    %s62 = sphi 0, %s59
    %s63 = sphi 0, %s62
    %s79 = sphi 0, %s63
    %s85 = sphi 0, %s87
    %s88 = sphi 0, %s85
    %s89 = sphi 0, %s88
    %s105 = sphi 0, %s89
    %s113 = sphi 0, %s115
    %s116 = sphi 0, %s113
    %s117 = sphi 0, %s116
    %s133 = sphi 0, %s117
  $region4: #{conv_block_forward.3} parent=0 // loop_header_branch
    %12 = sbr.rel (%p10) target = $region8
  $region5: #{conv_block_forward.3} parent=0 // loop_body
    %s14 = ssub.s32 %s9, 1
    %s15 = ssub.s32 %s9, 2
    %s22 = sadd.s32 1, %s17
    %p23 = scmp.ge.s32.totalorder %s22, 1
    %s24 = scalar_select %p23, 0, %s22
    %s25 = sadd.s32 1, %s16
    %s26 = scalar_select %p23, %s25, %s16
    %p27 = scmp.ge.s32.totalorder %s26, 2
    %s28 = scalar_select %p27, 0, %s26
    %s29 = ssub.s32 %s16, %s28
    %s30 = ssub.s32 %s17, %s24
    %s31 = sor.u32 %s29, %s30
    %p32 = scmp.eq.s32.totalorder %s31, 0
    %s34 = sadd.s32 %s33, 1
    %s35 = scalar_select %p32, %s33, %s34
    %p38 = pneg %p32
    %p39 = scmp.eq.s32.totalorder %s9, 1
    %p40 = por %p38, %p39
    %p41 = scmp.ne.s32.totalorder %s33, %s36
    %p42 = scmp.eq.s32.totalorder %s9, 0
    %p43 = por %p41, %p42
    %p44 = scmp.ne.s32.totalorder %s33, %s36
    %p45 = scmp.eq.s32.totalorder %s14, 1
    %p46 = por %p44, %p45
    %p47 = scmp.ne.s32.totalorder %s36, %s37
    %p48 = scmp.eq.s32.totalorder %s14, 0
    %p49 = por %p47, %p48
    %p50 = scmp.ne.s32.totalorder %s36, %s37
    %p51 = scmp.eq.s32.totalorder %s15, 1
    %p52 = por %p50, %p51
    %p54 = scmp.ne.s32.totalorder %s37, %s53
    %p55 = scmp.eq.s32.totalorder %s15, 0
    %p56 = por %p54, %p55
    %s57 = ssub.s32 %s17, %s24
    %p58 = scmp.eq.s32.totalorder %s57, 0
    %s60 = sadd.s32 %s59, 1
    %s61 = scalar_select %p58, %s59, %s60
    %p64 = pneg %p58
    %p65 = scmp.eq.s32.totalorder %s9, 1
    %p66 = por %p64, %p65
    %p67 = scmp.ne.s32.totalorder %s59, %s62
    %p68 = scmp.eq.s32.totalorder %s9, 0
    %p69 = por %p67, %p68
    %p70 = scmp.ne.s32.totalorder %s59, %s62
    %p71 = scmp.eq.s32.totalorder %s14, 1
    %p72 = por %p70, %p71
    %p73 = scmp.ne.s32.totalorder %s62, %s63
    %p74 = scmp.eq.s32.totalorder %s14, 0
    %p75 = por %p73, %p74
    %p76 = scmp.ne.s32.totalorder %s62, %s63
    %p77 = scmp.eq.s32.totalorder %s15, 1
    %p78 = por %p76, %p77
    %p80 = scmp.ne.s32.totalorder %s63, %s79
    %p81 = scmp.eq.s32.totalorder %s15, 0
    %p82 = por %p80, %p81
    %s83 = ssub.s32 %s17, %s24
    %p84 = scmp.eq.s32.totalorder %s83, 0
    %s86 = sadd.s32 %s85, 1
    %s87 = scalar_select %p84, %s85, %s86
    %p90 = pneg %p84
    %p91 = scmp.eq.s32.totalorder %s9, 1
    %p92 = por %p90, %p91
    %p93 = scmp.ne.s32.totalorder %s85, %s88
    %p94 = scmp.eq.s32.totalorder %s9, 0
    %p95 = por %p93, %p94
    %p96 = scmp.ne.s32.totalorder %s85, %s88
    %p97 = scmp.eq.s32.totalorder %s14, 1
    %p98 = por %p96, %p97
    %p99 = scmp.ne.s32.totalorder %s88, %s89
    %p100 = scmp.eq.s32.totalorder %s14, 0
    %p101 = por %p99, %p100
    %p102 = scmp.ne.s32.totalorder %s88, %s89
    %p103 = scmp.eq.s32.totalorder %s15, 1
    %p104 = por %p102, %p103
    %p106 = scmp.ne.s32.totalorder %s89, %s105
    %p107 = scmp.eq.s32.totalorder %s15, 0
    %p108 = por %p106, %p107
    %s109 = ssub.s32 %s16, %s28
    %s110 = ssub.s32 %s17, %s24
    %s111 = sor.u32 %s109, %s110
    %p112 = scmp.eq.s32.totalorder %s111, 0
    %s114 = sadd.s32 %s113, 1
    %s115 = scalar_select %p112, %s113, %s114
    %p118 = pneg %p112
    %p119 = scmp.eq.s32.totalorder %s9, 1
    %p120 = por %p118, %p119
    %p121 = scmp.ne.s32.totalorder %s113, %s116
    %p122 = scmp.eq.s32.totalorder %s9, 0
    %p123 = por %p121, %p122
    %p124 = scmp.ne.s32.totalorder %s113, %s116
    %p125 = scmp.eq.s32.totalorder %s14, 1
    %p126 = por %p124, %p125
    %p127 = scmp.ne.s32.totalorder %s116, %s117
    %p128 = scmp.eq.s32.totalorder %s14, 0
    %p129 = por %p127, %p128
    %p130 = scmp.ne.s32.totalorder %s116, %s117
    %p131 = scmp.eq.s32.totalorder %s15, 1
    %p132 = por %p130, %p131
    %p134 = scmp.ne.s32.totalorder %s117, %s133
    %p135 = scmp.eq.s32.totalorder %s15, 0
    %p136 = por %p134, %p135
    %p137 = scmp.le.s32.totalorder 1, %s9
    %p138 = scmp.lt.s32.totalorder %s9, 3
    %p139 = pnand %p137, %p138
    %p140 = pneg %p139
    // Predicated region
    $region9: #{conv_block_forward.3} parent=5 // pred_check
      _
    $region10: #{conv_block_forward.3} parent=5 // pred_check_branch
      %142 = sbr.rel (%p139) target = $region12
    $region11: #{conv_block_forward.3} parent=5 // pred_region
      %s143 = ssub.s32 %s9, 1
      // Predicated region
      $region13: #{conv_block_forward.3} parent=11 // pred_check
        %p144 = pneg %p75
      $region14: #{conv_block_forward.3} parent=11 // pred_check_branch
        %146 = sbr.rel (%p144) target = $region16
      $region15: #{conv_block_forward.3} parent=11 // pred_region
        %p147 = scmp.lt.s32.totalorder %s19, 0
        %s148 = scalar_select %p147, %s19, 0
        %s149 = scalar_lea.vmem %s1, %s148
      $region16: #{conv_block_forward.3} parent=11 // pred_fallthru
        _
      // Predicated region
      $region17: #{conv_block_forward.3} parent=11 // pred_check
        %p150 = pneg %p101
      $region18: #{conv_block_forward.3} parent=11 // pred_check_branch
        %152 = sbr.rel (%p150) target = $region20
      $region19: #{conv_block_forward.3} parent=11 // pred_region
        %p153 = scmp.lt.s32.totalorder %s19, 0
        %s154 = scalar_select %p153, %s19, 0
        %s155 = scalar_lea.vmem %s2, %s154
      $region20: #{conv_block_forward.3} parent=11 // pred_fallthru
        _
    $region12: #{conv_block_forward.3} parent=5 // pred_fallthru
      _
    %p156 = scmp.lt.s32.totalorder %s9, 2
    // Predicated region
    $region21: #{conv_block_forward.3} parent=5 // pred_check
      %p157 = pneg %p156
    $region22: #{conv_block_forward.3} parent=5 // pred_check_branch
      %159 = sbr.rel (%p157) target = $region24
    $region23: #{conv_block_forward.3} parent=5 // pred_region
      // Predicated region
      $region25: #{conv_block_forward.3} parent=23 // pred_check
        %p160 = pneg %p43
      $region26: #{conv_block_forward.3} parent=23 // pred_check_branch
        %162 = sbr.rel (%p160) target = $region28
      $region27: #{conv_block_forward.3} parent=23 // pred_region
        %s163 = smul.u32 32, %s16
        %p164 = scmp.lt.s32.totalorder %s163, 63
        %s165 = scalar_select %p164, %s163, 63
        %p166 = scmp.lt.s32.totalorder %s17, 0
        %s167 = scalar_select %p166, %s17, 0
        %s168 = sadd.s32 %s167, %s165
        %s169 = smul.addr %s168, 4
        %s170 = scalar_lea.vmem %s0, %s169
        %s171 = smul.u32 32, %s16
      $region28: #{conv_block_forward.3} parent=23 // pred_fallthru
        _
    $region24: #{conv_block_forward.3} parent=5 // pred_fallthru
      _
    %p172 = scmp.le.s32.totalorder 1, %s9
    %p173 = scmp.lt.s32.totalorder %s9, 3
    %p174 = pnand %p172, %p173
    %p175 = pneg %p174
    // Predicated region
    $region29: #{conv_block_forward.3} parent=5 // pred_check
      _
    $region30: #{conv_block_forward.3} parent=5 // pred_check_branch
      %177 = sbr.rel (%p174) target = $region32
    $region31: #{conv_block_forward.3} parent=5 // pred_region
      %s178 = ssub.s32 %s9, 1
      %s179 = smul.u32 32, %s18
      %p180 = scmp.lt.s32.totalorder %s179, 63
      %s181 = scalar_select %p180, %s179, 63
      %p182 = scmp.lt.s32.totalorder %s19, 0
      %s183 = scalar_select %p182, %s19, 0
      %s184 = sadd.s32 %s183, %s181
      %s185 = smul.addr %s184, 4
      %s186 = scalar_lea.vmem %s0, %s185
      %p187 = pneg %p49
      %p188 = pneg %p46
      %p189 = scmp.lt.s32.totalorder %s19, 0
      %s190 = scalar_select %p189, %s19, 0
      %s191 = scalar_lea.vmem %s1, %s190
      %p192 = pneg %p75
      %p193 = pneg %p72
      %p194 = scmp.lt.s32.totalorder %s19, 0
      %s195 = scalar_select %p194, %s19, 0
      %s196 = scalar_lea.vmem %s2, %s195
      %p197 = pneg %p101
      %p198 = pneg %p98
      %p199 = pneg %p129
      %p200 = pneg %p126
      %s201 = smul.u32 32, %s18
      %p202 = scmp.lt.s32.totalorder %s201, 63
      %s203 = scalar_select %p202, %s201, 63
      %p204 = scmp.lt.s32.totalorder %s19, 0
      %s205 = scalar_select %p204, %s19, 0
      %s206 = sadd.s32 %s205, %s203
      %s207 = smul.addr %s206, 4
      %s208 = scalar_lea.vmem %s3, %s207
      %s209 = smul.u32 32, %s18
      %p210 = scmp.lt.s32.totalorder %s209, 63
      %s211 = scalar_select %p210, %s209, 63
      %p212 = scmp.lt.s32.totalorder %s19, 0
      %s213 = scalar_select %p212, %s19, 0
      %s214 = sadd.s32 %s213, %s211
      %s215 = smul.addr %s214, 4
      %s216 = scalar_lea.vmem %s0, %s215
      %s217 = smul.u32 32, %s18
      %p218 = scmp.lt.s32.totalorder %s19, 0
      %s219 = scalar_select %p218, %s19, 0
      %s220 = scalar_lea.vmem %s1, %s219
      %p221 = scmp.lt.s32.totalorder %s19, 0
      %s222 = scalar_select %p221, %s19, 0
      %s223 = scalar_lea.vmem %s2, %s222
      %s224 = smul.u32 32, %s18
      %p225 = scmp.lt.s32.totalorder %s224, 63
      %s226 = scalar_select %p225, %s224, 63
      %p227 = scmp.lt.s32.totalorder %s19, 0
      %s228 = scalar_select %p227, %s19, 0
      %s229 = sadd.s32 %s228, %s226
      %s230 = smul.addr %s229, 4
      %s231 = scalar_lea.vmem %s3, %s230
      %s232 = smul.u32 32, %s18
      %v233 = vld [vmem:[%s216] sm:$0xf]
      %v234 = vld [vmem:[%s216 + $0x4] sm:$0xf]
      %v235 = vld [vmem:[%s216 + $0x8] sm:$0xf]
      %v236 = vld [vmem:[%s216 + $0xc] sm:$0xf]
      %v237 = vld [vmem:[%s216 + $0x10] sm:$0xf]
      %v238 = vld [vmem:[%s216 + $0x14] sm:$0xf]
      %v239 = vld [vmem:[%s216 + $0x18] sm:$0xf]
      %v240 = vld [vmem:[%s216 + $0x1c] sm:$0xf]
      %v241 = vld [vmem:[%s216 + $0x20] sm:$0xf]
      %v242 = vld [vmem:[%s216 + $0x24] sm:$0xf]
      %v243 = vld [vmem:[%s216 + $0x28] sm:$0xf]
      %v244 = vld [vmem:[%s216 + $0x2c] sm:$0xf]
      %v245 = vld [vmem:[%s216 + $0x30] sm:$0xf]
      %v246 = vld [vmem:[%s216 + $0x34] sm:$0xf]
      %v247 = vld [vmem:[%s216 + $0x38] sm:$0xf]
      %v248 = vld [vmem:[%s216 + $0x3c] sm:$0xf]
      %v249 = vld [vmem:[%s216 + $0x40] sm:$0xf]
      %v250 = vld [vmem:[%s216 + $0x44] sm:$0xf]
      %v251 = vld [vmem:[%s216 + $0x48] sm:$0xf]
      %v252 = vld [vmem:[%s216 + $0x4c] sm:$0xf]
      %v253 = vld [vmem:[%s216 + $0x50] sm:$0xf]
      %v254 = vld [vmem:[%s216 + $0x54] sm:$0xf]
      %v255 = vld [vmem:[%s216 + $0x58] sm:$0xf]
      %v256 = vld [vmem:[%s216 + $0x5c] sm:$0xf]
      %v257 = vld [vmem:[%s216 + $0x60] sm:$0xf]
      %v258 = vld [vmem:[%s216 + $0x64] sm:$0xf]
      %v259 = vld [vmem:[%s216 + $0x68] sm:$0xf]
      %v260 = vld [vmem:[%s216 + $0x6c] sm:$0xf]
      %v261 = vld [vmem:[%s216 + $0x70] sm:$0xf]
      %v262 = vld [vmem:[%s216 + $0x74] sm:$0xf]
      %v263 = vld [vmem:[%s216 + $0x78] sm:$0xf]
      %v264 = vld [vmem:[%s216 + $0x7c] sm:$0xf]
      %v265 = vunpack.c.l.bf16 %v233
      %v266 = vunpack.c.l.bf16 %v234
      %v267 = vunpack.c.l.bf16 %v235
      %v268 = vunpack.c.l.bf16 %v236
      %v269 = vunpack.c.l.bf16 %v237
      %v270 = vunpack.c.l.bf16 %v238
      %v271 = vunpack.c.l.bf16 %v239
      %v272 = vunpack.c.l.bf16 %v240
      %v273 = vunpack.c.l.bf16 %v241
      %v274 = vunpack.c.l.bf16 %v242
      %v275 = vunpack.c.l.bf16 %v243
      %v276 = vunpack.c.l.bf16 %v244
      %v277 = vunpack.c.l.bf16 %v245
      %v278 = vunpack.c.l.bf16 %v246
      %v279 = vunpack.c.l.bf16 %v247
      %v280 = vunpack.c.l.bf16 %v248
      %v281 = vunpack.c.l.bf16 %v249
      %v282 = vunpack.c.l.bf16 %v250
      %v283 = vunpack.c.l.bf16 %v251
      %v284 = vunpack.c.l.bf16 %v252
      %v285 = vunpack.c.l.bf16 %v253
      %v286 = vunpack.c.l.bf16 %v254
      %v287 = vunpack.c.l.bf16 %v255
      %v288 = vunpack.c.l.bf16 %v256
      %v289 = vunpack.c.l.bf16 %v257
      %v290 = vunpack.c.l.bf16 %v258
      %v291 = vunpack.c.l.bf16 %v259
      %v292 = vunpack.c.l.bf16 %v260
      %v293 = vunpack.c.l.bf16 %v261
      %v294 = vunpack.c.l.bf16 %v262
      %v295 = vunpack.c.l.bf16 %v263
      %v296 = vunpack.c.l.bf16 %v264
      %v297 = vld [vmem:[%s220] sm:$0x1]
      %v299 = vlaneseq
      %v300 = vshrl.u32 %v299, 7
      %v301 = vsub.s32 0, %v300
      %v302 = vrot.slane %v297, %v301
      %v304 = vmul.f32 %v265, %v302
      %v305 = vmul.f32 %v266, %v302
      %v306 = vmul.f32 %v267, %v302
      %v307 = vmul.f32 %v268, %v302
      %v308 = vmul.f32 %v269, %v302
      %v309 = vmul.f32 %v270, %v302
      %v310 = vmul.f32 %v271, %v302
      %v311 = vmul.f32 %v272, %v302
      %v312 = vmul.f32 %v273, %v302
      %v313 = vmul.f32 %v274, %v302
      %v314 = vmul.f32 %v275, %v302
      %v315 = vmul.f32 %v276, %v302
      %v316 = vmul.f32 %v277, %v302
      %v317 = vmul.f32 %v278, %v302
      %v318 = vmul.f32 %v279, %v302
      %v319 = vmul.f32 %v280, %v302
      %v320 = vmul.f32 %v281, %v302
      %v321 = vmul.f32 %v282, %v302
      %v322 = vmul.f32 %v283, %v302
      %v323 = vmul.f32 %v284, %v302
      %v324 = vmul.f32 %v285, %v302
      %v325 = vmul.f32 %v286, %v302
      %v326 = vmul.f32 %v287, %v302
      %v327 = vmul.f32 %v288, %v302
      %v328 = vmul.f32 %v289, %v302
      %v329 = vmul.f32 %v290, %v302
      %v330 = vmul.f32 %v291, %v302
      %v331 = vmul.f32 %v292, %v302
      %v332 = vmul.f32 %v293, %v302
      %v333 = vmul.f32 %v294, %v302
      %v334 = vmul.f32 %v295, %v302
      %v335 = vmul.f32 %v296, %v302
      %v336 = vld [vmem:[%s223] sm:$0x1]
      %v338 = vlaneseq
      %v339 = vshrl.u32 %v338, 7
      %v340 = vsub.s32 0, %v339
      %v341 = vrot.slane %v336, %v340
      %v343 = vadd.f32 %v304, %v341
      %v344 = vadd.f32 %v305, %v341
      %v345 = vadd.f32 %v306, %v341
      %v346 = vadd.f32 %v307, %v341
      %v347 = vadd.f32 %v308, %v341
      %v348 = vadd.f32 %v309, %v341
      %v349 = vadd.f32 %v310, %v341
      %v350 = vadd.f32 %v311, %v341
      %v351 = vadd.f32 %v312, %v341
      %v352 = vadd.f32 %v313, %v341
      %v353 = vadd.f32 %v314, %v341
      %v354 = vadd.f32 %v315, %v341
      %v355 = vadd.f32 %v316, %v341
      %v356 = vadd.f32 %v317, %v341
      %v357 = vadd.f32 %v318, %v341
      %v358 = vadd.f32 %v319, %v341
      %v359 = vadd.f32 %v320, %v341
      %v360 = vadd.f32 %v321, %v341
      %v361 = vadd.f32 %v322, %v341
      %v362 = vadd.f32 %v323, %v341
      %v363 = vadd.f32 %v324, %v341
      %v364 = vadd.f32 %v325, %v341
      %v365 = vadd.f32 %v326, %v341
      %v366 = vadd.f32 %v327, %v341
      %v367 = vadd.f32 %v328, %v341
      %v368 = vadd.f32 %v329, %v341
      %v369 = vadd.f32 %v330, %v341
      %v370 = vadd.f32 %v331, %v341
      %v371 = vadd.f32 %v332, %v341
      %v372 = vadd.f32 %v333, %v341
      %v373 = vadd.f32 %v334, %v341
      %v374 = vadd.f32 %v335, %v341
      %v375 = vmax.f32 %v343, 0.0
      %v376 = vmax.f32 %v344, 0.0
      %v377 = vmax.f32 %v345, 0.0
      %v378 = vmax.f32 %v346, 0.0
      %v379 = vmax.f32 %v347, 0.0
      %v380 = vmax.f32 %v348, 0.0
      %v381 = vmax.f32 %v349, 0.0
      %v382 = vmax.f32 %v350, 0.0
      %v383 = vmax.f32 %v351, 0.0
      %v384 = vmax.f32 %v352, 0.0
      %v385 = vmax.f32 %v353, 0.0
      %v386 = vmax.f32 %v354, 0.0
      %v387 = vmax.f32 %v355, 0.0
      %v388 = vmax.f32 %v356, 0.0
      %v389 = vmax.f32 %v357, 0.0
      %v390 = vmax.f32 %v358, 0.0
      %v391 = vmax.f32 %v359, 0.0
      %v392 = vmax.f32 %v360, 0.0
      %v393 = vmax.f32 %v361, 0.0
      %v394 = vmax.f32 %v362, 0.0
      %v395 = vmax.f32 %v363, 0.0
      %v396 = vmax.f32 %v364, 0.0
      %v397 = vmax.f32 %v365, 0.0
      %v398 = vmax.f32 %v366, 0.0
      %v399 = vmax.f32 %v367, 0.0
      %v400 = vmax.f32 %v368, 0.0
      %v401 = vmax.f32 %v369, 0.0
      %v402 = vmax.f32 %v370, 0.0
      %v403 = vmax.f32 %v371, 0.0
      %v404 = vmax.f32 %v372, 0.0
      %v405 = vmax.f32 %v373, 0.0
      %v406 = vmax.f32 %v374, 0.0
      %v407 = vpack.c.bf16 %v376, %v375
      %v408 = vpack.c.bf16 %v378, %v377
      %v409 = vpack.c.bf16 %v380, %v379
      %v410 = vpack.c.bf16 %v382, %v381
      %v411 = vpack.c.bf16 %v384, %v383
      %v412 = vpack.c.bf16 %v386, %v385
      %v413 = vpack.c.bf16 %v388, %v387
      %v414 = vpack.c.bf16 %v390, %v389
      %v415 = vpack.c.bf16 %v392, %v391
      %v416 = vpack.c.bf16 %v394, %v393
      %v417 = vpack.c.bf16 %v396, %v395
      %v418 = vpack.c.bf16 %v398, %v397
      %v419 = vpack.c.bf16 %v400, %v399
      %v420 = vpack.c.bf16 %v402, %v401
      %v421 = vpack.c.bf16 %v404, %v403
      %v422 = vpack.c.bf16 %v406, %v405
      %v439 = vunpack.c.l.b16 %v407
      %v440 = vunpack.c.h.b16 %v407
      %v441 = vunpack.c.l.b16 %v408
      %v442 = vunpack.c.h.b16 %v408
      %v443 = vunpack.c.l.b16 %v409
      %v444 = vunpack.c.h.b16 %v409
      %v445 = vunpack.c.l.b16 %v410
      %v446 = vunpack.c.h.b16 %v410
      %v447 = vunpack.c.l.b16 %v411
      %v448 = vunpack.c.h.b16 %v411
      %v449 = vunpack.c.l.b16 %v412
      %v450 = vunpack.c.h.b16 %v412
      %v451 = vunpack.c.l.b16 %v413
      %v452 = vunpack.c.h.b16 %v413
      %v453 = vunpack.c.l.b16 %v414
      %v454 = vunpack.c.h.b16 %v414
      %v455 = vunpack.c.l.b16 %v415
      %v456 = vunpack.c.h.b16 %v415
      %v457 = vunpack.c.l.b16 %v416
      %v458 = vunpack.c.h.b16 %v416
      %v459 = vunpack.c.l.b16 %v417
      %v460 = vunpack.c.h.b16 %v417
      %v461 = vunpack.c.l.b16 %v418
      %v462 = vunpack.c.h.b16 %v418
      %v463 = vunpack.c.l.b16 %v419
      %v464 = vunpack.c.h.b16 %v419
      %v465 = vunpack.c.l.b16 %v420
      %v466 = vunpack.c.h.b16 %v420
      %v467 = vunpack.c.l.b16 %v421
      %v468 = vunpack.c.h.b16 %v421
      %v469 = vunpack.c.l.b16 %v422
      %v470 = vunpack.c.h.b16 %v422
      %v471 = vpack.c.b16 %v439, %v439
      %v472 = vpack.c.b16 %v440, %v440
      %v473 = vpack.c.b16 %v441, %v441
      %v474 = vpack.c.b16 %v442, %v442
      %v475 = vpack.c.b16 %v443, %v443
      %v476 = vpack.c.b16 %v444, %v444
      %v477 = vpack.c.b16 %v445, %v445
      %v478 = vpack.c.b16 %v446, %v446
      %v479 = vpack.c.b16 %v447, %v447
      %v480 = vpack.c.b16 %v448, %v448
      %v481 = vpack.c.b16 %v449, %v449
      %v482 = vpack.c.b16 %v450, %v450
      %v483 = vpack.c.b16 %v451, %v451
      %v484 = vpack.c.b16 %v452, %v452
      %v485 = vpack.c.b16 %v453, %v453
      %v486 = vpack.c.b16 %v454, %v454
      %v487 = vpack.c.b16 %v455, %v455
      %v488 = vpack.c.b16 %v456, %v456
      %v489 = vpack.c.b16 %v457, %v457
      %v490 = vpack.c.b16 %v458, %v458
      %v491 = vpack.c.b16 %v459, %v459
      %v492 = vpack.c.b16 %v460, %v460
      %v493 = vpack.c.b16 %v461, %v461
      %v494 = vpack.c.b16 %v462, %v462
      %v495 = vpack.c.b16 %v463, %v463
      %v496 = vpack.c.b16 %v464, %v464
      %v497 = vpack.c.b16 %v465, %v465
      %v498 = vpack.c.b16 %v466, %v466
      %v499 = vpack.c.b16 %v467, %v467
      %v500 = vpack.c.b16 %v468, %v468
      %v501 = vpack.c.b16 %v469, %v469
      %v502 = vpack.c.b16 %v470, %v470
      %535 = vst [vmem:[%s231] sm:$0xf] %v471
      %536 = vst [vmem:[%s231 + $0x4] sm:$0xf] %v472
      %537 = vst [vmem:[%s231 + $0x8] sm:$0xf] %v473
      %538 = vst [vmem:[%s231 + $0xc] sm:$0xf] %v474
      %539 = vst [vmem:[%s231 + $0x10] sm:$0xf] %v475
      %540 = vst [vmem:[%s231 + $0x14] sm:$0xf] %v476
      %541 = vst [vmem:[%s231 + $0x18] sm:$0xf] %v477
      %542 = vst [vmem:[%s231 + $0x1c] sm:$0xf] %v478
      %543 = vst [vmem:[%s231 + $0x20] sm:$0xf] %v479
      %544 = vst [vmem:[%s231 + $0x24] sm:$0xf] %v480
      %545 = vst [vmem:[%s231 + $0x28] sm:$0xf] %v481
      %546 = vst [vmem:[%s231 + $0x2c] sm:$0xf] %v482
      %547 = vst [vmem:[%s231 + $0x30] sm:$0xf] %v483
      %548 = vst [vmem:[%s231 + $0x34] sm:$0xf] %v484
      %549 = vst [vmem:[%s231 + $0x38] sm:$0xf] %v485
      %550 = vst [vmem:[%s231 + $0x3c] sm:$0xf] %v486
      %551 = vst [vmem:[%s231 + $0x40] sm:$0xf] %v487
      %552 = vst [vmem:[%s231 + $0x44] sm:$0xf] %v488
      %553 = vst [vmem:[%s231 + $0x48] sm:$0xf] %v489
      %554 = vst [vmem:[%s231 + $0x4c] sm:$0xf] %v490
      %555 = vst [vmem:[%s231 + $0x50] sm:$0xf] %v491
      %556 = vst [vmem:[%s231 + $0x54] sm:$0xf] %v492
      %557 = vst [vmem:[%s231 + $0x58] sm:$0xf] %v493
      %558 = vst [vmem:[%s231 + $0x5c] sm:$0xf] %v494
      %559 = vst [vmem:[%s231 + $0x60] sm:$0xf] %v495
      %560 = vst [vmem:[%s231 + $0x64] sm:$0xf] %v496
      %561 = vst [vmem:[%s231 + $0x68] sm:$0xf] %v497
      %562 = vst [vmem:[%s231 + $0x6c] sm:$0xf] %v498
      %563 = vst [vmem:[%s231 + $0x70] sm:$0xf] %v499
      %564 = vst [vmem:[%s231 + $0x74] sm:$0xf] %v500
      %565 = vst [vmem:[%s231 + $0x78] sm:$0xf] %v501
      %566 = vst [vmem:[%s231 + $0x7c] sm:$0xf] %v502
      %s567 = smul.u32 32, %s18
      %p568 = scmp.lt.s32.totalorder %s567, 63
      %s569 = scalar_select %p568, %s567, 63
      %p570 = scmp.lt.s32.totalorder %s19, 0
      %s571 = scalar_select %p570, %s19, 0
      %s572 = sadd.s32 %s571, %s569
      %s573 = smul.addr %s572, 4
      %s574 = scalar_lea.vmem %s3, %s573
      // Predicated region
      $region33: #{conv_block_forward.3} parent=31 // pred_check
        %p575 = pneg %p126
      $region34: #{conv_block_forward.3} parent=31 // pred_check_branch
        %577 = sbr.rel (%p575) target = $region36
      $region35: #{conv_block_forward.3} parent=31 // pred_region
        %s578 = smul.u32 32, %s18
      $region36: #{conv_block_forward.3} parent=31 // pred_fallthru
        _
    $region32: #{conv_block_forward.3} parent=5 // pred_fallthru
      _
    %p579 = scmp.le.s32.totalorder 2, %s9
    // Predicated region
    $region37: #{conv_block_forward.3} parent=5 // pred_check
      %p580 = pneg %p579
    $region38: #{conv_block_forward.3} parent=5 // pred_check_branch
      %582 = sbr.rel (%p580) target = $region40
    $region39: #{conv_block_forward.3} parent=5 // pred_region
      %s583 = ssub.s32 %s9, 2
      // Predicated region
      $region41: #{conv_block_forward.3} parent=39 // pred_check
        %p584 = pneg %p132
      $region42: #{conv_block_forward.3} parent=39 // pred_check_branch
        %586 = sbr.rel (%p584) target = $region44
      $region43: #{conv_block_forward.3} parent=39 // pred_region
        %s587 = smul.u32 32, %s20
        %p588 = scmp.lt.s32.totalorder %s587, 63
        %s589 = scalar_select %p588, %s587, 63
        %p590 = scmp.lt.s32.totalorder %s21, 0
        %s591 = scalar_select %p590, %s21, 0
        %s592 = sadd.s32 %s591, %s589
        %s593 = smul.addr %s592, 4
        %s594 = scalar_lea.vmem %s3, %s593
      $region44: #{conv_block_forward.3} parent=39 // pred_fallthru
        _
    $region40: #{conv_block_forward.3} parent=5 // pred_fallthru
      _
  $region6: #{conv_block_forward.3} parent=0 // loop_footer
    %s13 = sadd.s32 1, %s9
  $region7: #{conv_block_forward.3} parent=0 // loop_footer_branch
    %8 = sbr.rel target = $region3
  $region8: #{conv_block_forward.3} parent=0 // loop_exit
    _

// kernel: conv_block_forward.2
$region0: #{conv_block_forward.2}
  #allocation0 [shape = 'u32[]', space=smem, size = 0x4, offset = 0x4, fixed_abs, tag = 'smem constant byte address 0x4 - core index']
  #allocation1 [shape = 'u32[144,128]{1,0:T(1,128)}', space=vmem, size = 0x12000, scoped, tag = 'internal scratch']
  #allocation2 [shape = 'f32[256,128]{1,0:T(8,128)}', space=vmem, size = 0x20000, scoped, tag = 'scratch operand']
  %s0 = inlined_call_operand.vmem [shape: bf16[512,128], index: 0, kind: input, shape index: {}]
  %s1 = inlined_call_operand.vmem [shape: bf16[128,128], index: 1, kind: input, shape index: {}]
  %s2 = inlined_call_operand.vmem [shape: bf16[512,128], index: 2, kind: output, shape index: {0}]
  %s3 = inlined_call_operand.vmem [shape: f32[16,128], index: 3, kind: output, shape index: {1}]
  %s4 = inlined_call_operand.vmem [shape: f32[16,128], index: 4, kind: output, shape index: {2}]
  %5 = xla_tuple %s2, %s3, %s4
  %s6 = sld [smem:[#allocation0]]
  $region69: #{conv_block_forward.2} parent=0
    _
  %s8 = ssub.s32 1, %s6
  %s9 = scalar_select 0, %s8, %s6
  loop: start=0, step=1, limit=4
  $region2: #{conv_block_forward.2} parent=0 // loop_pre_header
    _
  $region3: #{conv_block_forward.2} parent=0 // loop_header
    %s11 = sphi 0, %s15
    %p12 = scmp.ge.s32.totalorder %s11, 4
    %s18 = sphi 0, %s37
    %s19 = sphi 0, %s33
    %s20 = sphi 0, %s29
    %s21 = sphi 0, %s18
    %s22 = sphi 0, %s19
    %s23 = sphi 0, %s20
    %s24 = sphi 0, %s21
    %s25 = sphi 0, %s22
    %s26 = sphi 0, %s23
    %s42 = sphi 0, %s44
    %s45 = sphi 0, %s42
    %s46 = sphi 0, %s45
    %s62 = sphi 0, %s46
    %s70 = sphi 0, %s72
    %s73 = sphi 0, %s70
    %s74 = sphi 0, %s73
    %s90 = sphi 0, %s74
    %s98 = sphi 0, %s100
    %s101 = sphi 0, %s98
    %s102 = sphi 0, %s101
    %s118 = sphi 0, %s102
    %s126 = sphi 0, %s128
    %s129 = sphi 0, %s126
    %s130 = sphi 0, %s129
    %s146 = sphi 0, %s130
    %s154 = sphi 0, %s156
    %s157 = sphi 0, %s154
    %s158 = sphi 0, %s157
    %s174 = sphi 0, %s158
  $region4: #{conv_block_forward.2} parent=0 // loop_header_branch
    %14 = sbr.rel (%p12) target = $region8
  $region5: #{conv_block_forward.2} parent=0 // loop_body
    %s16 = ssub.s32 %s11, 1
    %s17 = ssub.s32 %s11, 2
    %s27 = sadd.s32 1, %s20
    %p28 = scmp.ge.s32.totalorder %s27, 1
    %s29 = scalar_select %p28, 0, %s27
    %s30 = sadd.s32 1, %s19
    %s31 = scalar_select %p28, %s30, %s19
    %p32 = scmp.ge.s32.totalorder %s31, 1
    %s33 = scalar_select %p32, 0, %s31
    %s34 = sadd.s32 1, %s18
    %s35 = scalar_select %p32, %s34, %s18
    %p36 = scmp.ge.s32.totalorder %s35, 2
    %s37 = scalar_select %p36, 0, %s35
    %s38 = ssub.s32 %s18, %s37
    %s39 = ssub.s32 %s20, %s29
    %s40 = sor.u32 %s38, %s39
    %p41 = scmp.eq.s32.totalorder %s40, 0
    %s43 = sadd.s32 %s42, 1
    %s44 = scalar_select %p41, %s42, %s43
    %p47 = pneg %p41
    %p48 = scmp.eq.s32.totalorder %s11, 1
    %p49 = por %p47, %p48
    %p50 = scmp.ne.s32.totalorder %s42, %s45
    %p51 = scmp.eq.s32.totalorder %s11, 0
    %p52 = por %p50, %p51
    %p53 = scmp.ne.s32.totalorder %s42, %s45
    %p54 = scmp.eq.s32.totalorder %s16, 1
    %p55 = por %p53, %p54
    %p56 = scmp.ne.s32.totalorder %s45, %s46
    %p57 = scmp.eq.s32.totalorder %s16, 0
    %p58 = por %p56, %p57
    %p59 = scmp.ne.s32.totalorder %s45, %s46
    %p60 = scmp.eq.s32.totalorder %s17, 1
    %p61 = por %p59, %p60
    %p63 = scmp.ne.s32.totalorder %s46, %s62
    %p64 = scmp.eq.s32.totalorder %s17, 0
    %p65 = por %p63, %p64
    %s66 = ssub.s32 %s20, %s29
    %s67 = ssub.s32 %s19, %s33
    %s68 = sor.u32 %s66, %s67
    %p69 = scmp.eq.s32.totalorder %s68, 0
    %s71 = sadd.s32 %s70, 1
    %s72 = scalar_select %p69, %s70, %s71
    %p75 = pneg %p69
    %p76 = scmp.eq.s32.totalorder %s11, 1
    %p77 = por %p75, %p76
    %p78 = scmp.ne.s32.totalorder %s70, %s73
    %p79 = scmp.eq.s32.totalorder %s11, 0
    %p80 = por %p78, %p79
    %p81 = scmp.ne.s32.totalorder %s70, %s73
    %p82 = scmp.eq.s32.totalorder %s16, 1
    %p83 = por %p81, %p82
    %p84 = scmp.ne.s32.totalorder %s73, %s74
    %p85 = scmp.eq.s32.totalorder %s16, 0
    %p86 = por %p84, %p85
    %p87 = scmp.ne.s32.totalorder %s73, %s74
    %p88 = scmp.eq.s32.totalorder %s17, 1
    %p89 = por %p87, %p88
    %p91 = scmp.ne.s32.totalorder %s74, %s90
    %p92 = scmp.eq.s32.totalorder %s17, 0
    %p93 = por %p91, %p92
    %s94 = ssub.s32 %s18, %s37
    %s95 = ssub.s32 %s19, %s33
    %s96 = sor.u32 %s94, %s95
    %p97 = scmp.eq.s32.totalorder %s96, 0
    %s99 = sadd.s32 %s98, 1
    %s100 = scalar_select %p97, %s98, %s99
    %p103 = pneg %p97
    %p104 = scmp.eq.s32.totalorder %s11, 1
    %p105 = por %p103, %p104
    %p106 = scmp.ne.s32.totalorder %s98, %s101
    %p107 = scmp.eq.s32.totalorder %s11, 0
    %p108 = por %p106, %p107
    %p109 = scmp.ne.s32.totalorder %s98, %s101
    %p110 = scmp.eq.s32.totalorder %s16, 1
    %p111 = por %p109, %p110
    %p112 = scmp.ne.s32.totalorder %s101, %s102
    %p113 = scmp.eq.s32.totalorder %s16, 0
    %p114 = por %p112, %p113
    %p115 = scmp.ne.s32.totalorder %s101, %s102
    %p116 = scmp.eq.s32.totalorder %s17, 1
    %p117 = por %p115, %p116
    %p119 = scmp.ne.s32.totalorder %s102, %s118
    %p120 = scmp.eq.s32.totalorder %s17, 0
    %p121 = por %p119, %p120
    %s122 = ssub.s32 %s18, %s37
    %s123 = ssub.s32 %s19, %s33
    %s124 = sor.u32 %s122, %s123
    %p125 = scmp.eq.s32.totalorder %s124, 0
    %s127 = sadd.s32 %s126, 1
    %s128 = scalar_select %p125, %s126, %s127
    %p131 = pneg %p125
    %p132 = scmp.eq.s32.totalorder %s11, 1
    %p133 = por %p131, %p132
    %p134 = scmp.ne.s32.totalorder %s126, %s129
    %p135 = scmp.eq.s32.totalorder %s11, 0
    %p136 = por %p134, %p135
    %p137 = scmp.ne.s32.totalorder %s126, %s129
    %p138 = scmp.eq.s32.totalorder %s16, 1
    %p139 = por %p137, %p138
    %p140 = scmp.ne.s32.totalorder %s129, %s130
    %p141 = scmp.eq.s32.totalorder %s16, 0
    %p142 = por %p140, %p141
    %p143 = scmp.ne.s32.totalorder %s129, %s130
    %p144 = scmp.eq.s32.totalorder %s17, 1
    %p145 = por %p143, %p144
    %p147 = scmp.ne.s32.totalorder %s130, %s146
    %p148 = scmp.eq.s32.totalorder %s17, 0
    %p149 = por %p147, %p148
    %s150 = ssub.s32 %s18, %s37
    %s151 = ssub.s32 %s19, %s33
    %s152 = sor.u32 %s150, %s151
    %p153 = scmp.eq.s32.totalorder %s152, 0
    %s155 = sadd.s32 %s154, 1
    %s156 = scalar_select %p153, %s154, %s155
    %p159 = pneg %p153
    %p160 = scmp.eq.s32.totalorder %s11, 1
    %p161 = por %p159, %p160
    %p162 = scmp.ne.s32.totalorder %s154, %s157
    %p163 = scmp.eq.s32.totalorder %s11, 0
    %p164 = por %p162, %p163
    %p165 = scmp.ne.s32.totalorder %s154, %s157
    %p166 = scmp.eq.s32.totalorder %s16, 1
    %p167 = por %p165, %p166
    %p168 = scmp.ne.s32.totalorder %s157, %s158
    %p169 = scmp.eq.s32.totalorder %s16, 0
    %p170 = por %p168, %p169
    %p171 = scmp.ne.s32.totalorder %s157, %s158
    %p172 = scmp.eq.s32.totalorder %s17, 1
    %p173 = por %p171, %p172
    %p175 = scmp.ne.s32.totalorder %s158, %s174
    %p176 = scmp.eq.s32.totalorder %s17, 0
    %p177 = por %p175, %p176
    %p178 = scmp.le.s32.totalorder 1, %s11
    %p179 = scmp.lt.s32.totalorder %s11, 3
    %p180 = pnand %p178, %p179
    %p181 = pneg %p180
    // Predicated region
    $region9: #{conv_block_forward.2} parent=5 // pred_check
      _
    $region10: #{conv_block_forward.2} parent=5 // pred_check_branch
      %183 = sbr.rel (%p180) target = $region12
    $region11: #{conv_block_forward.2} parent=5 // pred_region
      %s184 = ssub.s32 %s11, 1
      // Predicated region
      $region13: #{conv_block_forward.2} parent=11 // pred_check
        %p185 = pneg %p86
      $region14: #{conv_block_forward.2} parent=11 // pred_check_branch
        %187 = sbr.rel (%p185) target = $region16
      $region15: #{conv_block_forward.2} parent=11 // pred_region
        %s188 = smul.u32 16, %s23
        %p189 = scmp.lt.s32.totalorder %s188, 15
        %s190 = scalar_select %p189, %s188, 15
        %p191 = scmp.lt.s32.totalorder %s22, 0
        %s192 = scalar_select %p191, %s22, 0
        %s193 = sadd.s32 %s192, %s190
        %s194 = smul.addr %s193, 4
        %s195 = scalar_lea.vmem %s1, %s194
        %s196 = smul.u32 16, %s23
      $region16: #{conv_block_forward.2} parent=11 // pred_fallthru
        _
    $region12: #{conv_block_forward.2} parent=5 // pred_fallthru
      _
    %p197 = scmp.lt.s32.totalorder %s11, 2
    // Predicated region
    $region17: #{conv_block_forward.2} parent=5 // pred_check
      %p198 = pneg %p197
    $region18: #{conv_block_forward.2} parent=5 // pred_check_branch
      %200 = sbr.rel (%p198) target = $region20
    $region19: #{conv_block_forward.2} parent=5 // pred_region
      // Predicated region
      $region21: #{conv_block_forward.2} parent=19 // pred_check
        %p201 = pneg %p52
      $region22: #{conv_block_forward.2} parent=19 // pred_check_branch
        %203 = sbr.rel (%p201) target = $region24
      $region23: #{conv_block_forward.2} parent=19 // pred_region
        %s204 = smul.u32 32, %s18
        %p205 = scmp.lt.s32.totalorder %s204, 63
        %s206 = scalar_select %p205, %s204, 63
        %p207 = scmp.lt.s32.totalorder %s20, 0
        %s208 = scalar_select %p207, %s20, 0
        %s209 = sadd.s32 %s208, %s206
        %s210 = smul.addr %s209, 4
        %s211 = scalar_lea.vmem %s0, %s210
        %s212 = smul.u32 32, %s18
      $region24: #{conv_block_forward.2} parent=19 // pred_fallthru
        _
    $region20: #{conv_block_forward.2} parent=5 // pred_fallthru
      _
    %p213 = scmp.le.s32.totalorder 1, %s11
    %p214 = scmp.lt.s32.totalorder %s11, 3
    %p215 = pnand %p213, %p214
    %p216 = pneg %p215
    // Predicated region
    $region25: #{conv_block_forward.2} parent=5 // pred_check
      _
    $region26: #{conv_block_forward.2} parent=5 // pred_check_branch
      %218 = sbr.rel (%p215) target = $region28
    $region27: #{conv_block_forward.2} parent=5 // pred_region
      %s219 = ssub.s32 %s11, 1
      %s220 = smul.u32 32, %s21
      %p221 = scmp.lt.s32.totalorder %s220, 63
      %s222 = scalar_select %p221, %s220, 63
      %p223 = scmp.lt.s32.totalorder %s23, 0
      %s224 = scalar_select %p223, %s23, 0
      %s225 = sadd.s32 %s224, %s222
      %s226 = smul.addr %s225, 4
      %s227 = scalar_lea.vmem %s0, %s226
      %p228 = pneg %p58
      %p229 = pneg %p55
      %s230 = smul.u32 16, %s23
      %p231 = scmp.lt.s32.totalorder %s230, 15
      %s232 = scalar_select %p231, %s230, 15
      %p233 = scmp.lt.s32.totalorder %s22, 0
      %s234 = scalar_select %p233, %s22, 0
      %s235 = sadd.s32 %s234, %s232
      %s236 = smul.addr %s235, 4
      %s237 = scalar_lea.vmem %s1, %s236
      %p238 = pneg %p86
      %p239 = pneg %p83
      %p240 = pneg %p114
      %p241 = pneg %p111
      %s242 = smul.u32 32, %s21
      %p243 = scmp.lt.s32.totalorder %s242, 63
      %s244 = scalar_select %p243, %s242, 63
      %p245 = scmp.lt.s32.totalorder %s22, 0
      %s246 = scalar_select %p245, %s22, 0
      %s247 = sadd.s32 %s246, %s244
      %s248 = smul.addr %s247, 4
      %s249 = scalar_lea.vmem %s2, %s248
      %p250 = pneg %p142
      %p251 = pneg %p139
      %p252 = scmp.lt.s32.totalorder %s21, 1
      %s253 = scalar_select %p252, %s21, 1
      %p254 = scmp.lt.s32.totalorder %s22, 0
      %s255 = scalar_select %p254, %s22, 0
      %s256 = sadd.s32 %s255, %s253
      %s257 = smul.addr %s256, 8
      %s258 = scalar_lea.vmem %s3, %s257
      %p259 = pneg %p170
      %p260 = pneg %p167
      %p261 = scmp.lt.s32.totalorder %s21, 1
      %s262 = scalar_select %p261, %s21, 1
      %p263 = scmp.lt.s32.totalorder %s22, 0
      %s264 = scalar_select %p263, %s22, 0
      %s265 = sadd.s32 %s264, %s262
      %s266 = smul.addr %s265, 8
      %s267 = scalar_lea.vmem %s4, %s266
      %s268 = smul.u32 32, %s21
      %p269 = scmp.lt.s32.totalorder %s268, 63
      %s270 = scalar_select %p269, %s268, 63
      %p271 = scmp.lt.s32.totalorder %s23, 0
      %s272 = scalar_select %p271, %s23, 0
      %s273 = sadd.s32 %s272, %s270
      %s274 = smul.addr %s273, 4
      %s275 = scalar_lea.vmem %s0, %s274
      %s276 = smul.u32 32, %s21
      %s277 = smul.u32 16, %s23
      %p278 = scmp.lt.s32.totalorder %s277, 15
      %s279 = scalar_select %p278, %s277, 15
      %p280 = scmp.lt.s32.totalorder %s22, 0
      %s281 = scalar_select %p280, %s22, 0
      %s282 = sadd.s32 %s281, %s279
      %s283 = smul.addr %s282, 4
      %s284 = scalar_lea.vmem %s1, %s283
      %s285 = smul.u32 16, %s23
      %s286 = smul.u32 32, %s21
      %p287 = scmp.lt.s32.totalorder %s286, 63
      %s288 = scalar_select %p287, %s286, 63
      %p289 = scmp.lt.s32.totalorder %s22, 0
      %s290 = scalar_select %p289, %s22, 0
      %s291 = sadd.s32 %s290, %s288
      %s292 = smul.addr %s291, 4
      %s293 = scalar_lea.vmem %s2, %s292
      %s294 = smul.u32 32, %s21
      %p295 = scmp.lt.s32.totalorder %s21, 1
      %s296 = scalar_select %p295, %s21, 1
      %p297 = scmp.lt.s32.totalorder %s22, 0
      %s298 = scalar_select %p297, %s22, 0
      %s299 = sadd.s32 %s298, %s296
      %s300 = smul.addr %s299, 8
      %s301 = scalar_lea.vmem %s3, %s300
      %p302 = scmp.lt.s32.totalorder %s21, 1
      %s303 = scalar_select %p302, %s21, 1
      %p304 = scmp.lt.s32.totalorder %s22, 0
      %s305 = scalar_select %p304, %s22, 0
      %s306 = sadd.s32 %s305, %s303
      %s307 = smul.addr %s306, 8
      %s308 = scalar_lea.vmem %s4, %s307
      %v310 = vld [vmem:[%s275] sm:$0xf]
      %v311 = vld [vmem:[%s275 + $0x4] sm:$0xf]
      %v312 = vld [vmem:[%s275 + $0x8] sm:$0xf]
      %v313 = vld [vmem:[%s275 + $0xc] sm:$0xf]
      %v314 = vld [vmem:[%s275 + $0x10] sm:$0xf]
      %v315 = vld [vmem:[%s275 + $0x14] sm:$0xf]
      %v316 = vld [vmem:[%s275 + $0x18] sm:$0xf]
      %v317 = vld [vmem:[%s275 + $0x1c] sm:$0xf]
      %v318 = vld [vmem:[%s275 + $0x20] sm:$0xf]
      %v319 = vld [vmem:[%s275 + $0x24] sm:$0xf]
      %v320 = vld [vmem:[%s275 + $0x28] sm:$0xf]
      %v321 = vld [vmem:[%s275 + $0x2c] sm:$0xf]
      %v322 = vld [vmem:[%s275 + $0x30] sm:$0xf]
      %v323 = vld [vmem:[%s275 + $0x34] sm:$0xf]
      %v324 = vld [vmem:[%s275 + $0x38] sm:$0xf]
      %v325 = vld [vmem:[%s275 + $0x3c] sm:$0xf]
      %v326 = vld [vmem:[%s275 + $0x40] sm:$0xf]
      %v327 = vld [vmem:[%s275 + $0x44] sm:$0xf]
      %v328 = vld [vmem:[%s275 + $0x48] sm:$0xf]
      %v329 = vld [vmem:[%s275 + $0x4c] sm:$0xf]
      %v330 = vld [vmem:[%s275 + $0x50] sm:$0xf]
      %v331 = vld [vmem:[%s275 + $0x54] sm:$0xf]
      %v332 = vld [vmem:[%s275 + $0x58] sm:$0xf]
      %v333 = vld [vmem:[%s275 + $0x5c] sm:$0xf]
      %v334 = vld [vmem:[%s275 + $0x60] sm:$0xf]
      %v335 = vld [vmem:[%s275 + $0x64] sm:$0xf]
      %v336 = vld [vmem:[%s275 + $0x68] sm:$0xf]
      %v337 = vld [vmem:[%s275 + $0x6c] sm:$0xf]
      %v338 = vld [vmem:[%s275 + $0x70] sm:$0xf]
      %v339 = vld [vmem:[%s275 + $0x74] sm:$0xf]
      %v340 = vld [vmem:[%s275 + $0x78] sm:$0xf]
      %v341 = vld [vmem:[%s275 + $0x7c] sm:$0xf]
      %v342 = vld [vmem:[%s284] sm:$0xf]
      %v343 = vld [vmem:[%s284 + $0x4] sm:$0xf]
      %v344 = vld [vmem:[%s284 + $0x8] sm:$0xf]
      %v345 = vld [vmem:[%s284 + $0xc] sm:$0xf]
      %v346 = vld [vmem:[%s284 + $0x10] sm:$0xf]
      %v347 = vld [vmem:[%s284 + $0x14] sm:$0xf]
      %v348 = vld [vmem:[%s284 + $0x18] sm:$0xf]
      %v349 = vld [vmem:[%s284 + $0x1c] sm:$0xf]
      %v350 = vld [vmem:[%s284 + $0x20] sm:$0xf]
      %v351 = vld [vmem:[%s284 + $0x24] sm:$0xf]
      %v352 = vld [vmem:[%s284 + $0x28] sm:$0xf]
      %v353 = vld [vmem:[%s284 + $0x2c] sm:$0xf]
      %v354 = vld [vmem:[%s284 + $0x30] sm:$0xf]
      %v355 = vld [vmem:[%s284 + $0x34] sm:$0xf]
      %v356 = vld [vmem:[%s284 + $0x38] sm:$0xf]
      %v357 = vld [vmem:[%s284 + $0x3c] sm:$0xf]
      %v390 = vunpack.c.l.b16 %v310
      %v391 = vunpack.c.l.b16 %v311
      %v392 = vunpack.c.l.b16 %v312
      %v393 = vunpack.c.l.b16 %v313
      %v394 = vunpack.c.l.b16 %v314
      %v395 = vunpack.c.l.b16 %v315
      %v396 = vunpack.c.l.b16 %v316
      %v397 = vunpack.c.l.b16 %v317
      %v398 = vunpack.c.l.b16 %v318
      %v399 = vunpack.c.l.b16 %v319
      %v400 = vunpack.c.l.b16 %v320
      %v401 = vunpack.c.l.b16 %v321
      %v402 = vunpack.c.l.b16 %v322
      %v403 = vunpack.c.l.b16 %v323
      %v404 = vunpack.c.l.b16 %v324
      %v405 = vunpack.c.l.b16 %v325
      %v406 = vunpack.c.l.b16 %v326
      %v407 = vunpack.c.l.b16 %v327
      %v408 = vunpack.c.l.b16 %v328
      %v409 = vunpack.c.l.b16 %v329
      %v410 = vunpack.c.l.b16 %v330
      %v411 = vunpack.c.l.b16 %v331
      %v412 = vunpack.c.l.b16 %v332
      %v413 = vunpack.c.l.b16 %v333
      %v414 = vunpack.c.l.b16 %v334
      %v415 = vunpack.c.l.b16 %v335
      %v416 = vunpack.c.l.b16 %v336
      %v417 = vunpack.c.l.b16 %v337
      %v418 = vunpack.c.l.b16 %v338
      %v419 = vunpack.c.l.b16 %v339
      %v420 = vunpack.c.l.b16 %v340
      %v421 = vunpack.c.l.b16 %v341
      %v422 = vpack.c.b16 %v391, %v390
      %v423 = vpack.c.b16 %v393, %v392
      %v424 = vpack.c.b16 %v395, %v394
      %v425 = vpack.c.b16 %v397, %v396
      %v426 = vpack.c.b16 %v399, %v398
      %v427 = vpack.c.b16 %v401, %v400
      %v428 = vpack.c.b16 %v403, %v402
      %v429 = vpack.c.b16 %v405, %v404
      %v430 = vpack.c.b16 %v407, %v406
      %v431 = vpack.c.b16 %v409, %v408
      %v432 = vpack.c.b16 %v411, %v410
      %v433 = vpack.c.b16 %v413, %v412
      %v434 = vpack.c.b16 %v415, %v414
      %v435 = vpack.c.b16 %v417, %v416
      %v436 = vpack.c.b16 %v419, %v418
      %v437 = vpack.c.b16 %v421, %v420
      %v470 = vunpack.c.l.b16 %v342
      %v471 = vunpack.c.l.b16 %v343
      %v472 = vunpack.c.l.b16 %v344
      %v473 = vunpack.c.l.b16 %v345
      %v474 = vunpack.c.l.b16 %v346
      %v475 = vunpack.c.l.b16 %v347
      %v476 = vunpack.c.l.b16 %v348
      %v477 = vunpack.c.l.b16 %v349
      %v478 = vunpack.c.l.b16 %v350
      %v479 = vunpack.c.l.b16 %v351
      %v480 = vunpack.c.l.b16 %v352
      %v481 = vunpack.c.l.b16 %v353
      %v482 = vunpack.c.l.b16 %v354
      %v483 = vunpack.c.l.b16 %v355
      %v484 = vunpack.c.l.b16 %v356
      %v485 = vunpack.c.l.b16 %v357
      %v486 = vpack.c.b16 %v471, %v470
      %v487 = vpack.c.b16 %v473, %v472
      %v488 = vpack.c.b16 %v475, %v474
      %v489 = vpack.c.b16 %v477, %v476
      %v490 = vpack.c.b16 %v479, %v478
      %v491 = vpack.c.b16 %v481, %v480
      %v492 = vpack.c.b16 %v483, %v482
      %v493 = vpack.c.b16 %v485, %v484
      %502 = vmatprep.subr.bf16.mxu0 0
      %503 = vmatpush1.bf16.msra.mxu0 %v486
      %504 = vmatprep.subr.bf16.mxu0 0
      %505 = vmatpush1.bf16.msra.mxu0 %v487
      %506 = vmatprep.subr.bf16.mxu0 0
      %507 = vmatpush1.bf16.msra.mxu0 %v488
      %508 = vmatprep.subr.bf16.mxu0 0
      %509 = vmatpush1.bf16.msra.mxu0 %v489
      %510 = vmatprep.subr.bf16.mxu0 0
      %511 = vmatpush1.bf16.msra.mxu0 %v490
      %512 = vmatprep.subr.bf16.mxu0 0
      %513 = vmatpush1.bf16.msra.mxu0 %v491
      %514 = vmatprep.subr.bf16.mxu0 0
      %515 = vmatpush1.bf16.msra.mxu0 %v492
      %516 = vmatprep.subr.bf16.mxu0 0
      %517 = vmatpush1.bf16.msra.mxu0 %v493
      %518 = vmatprep.subr.bf16.mxu0 0
      %519 = vmatpush1.bf16.msra.mxu0 0
      %520 = vmatprep.subr.bf16.mxu0 0
      %521 = vmatpush1.bf16.msra.mxu0 0
      %522 = vmatprep.subr.bf16.mxu0 0
      %523 = vmatpush1.bf16.msra.mxu0 0
      %524 = vmatprep.subr.bf16.mxu0 0
      %525 = vmatpush1.bf16.msra.mxu0 0
      %526 = vmatprep.subr.bf16.mxu0 0
      %527 = vmatpush1.bf16.msra.mxu0 0
      %528 = vmatprep.subr.bf16.mxu0 0
      %529 = vmatpush1.bf16.msra.mxu0 0
      %530 = vmatprep.subr.bf16.mxu0 0
      %531 = vmatpush1.bf16.msra.mxu0 0
      %532 = vmatprep.subr.bf16.mxu0 0
      %533 = vmatpush1.bf16.msra.mxu0 0
      %534 = vmatprep.mubr.bf16.mxu0 0
      %535 = vmatmul.mubr.bf16.gmra.mrb[0].mxu0 %v422
      %v536 = vpop.f32.mrb[0].mxu0
      %v537 = vadd.f32 0.0, %v536
      %v538 = vpop.f32.mrb[0].mxu0
      %v539 = vpop.f32.mrb[0].mxu0
      %v540 = vadd.f32 0.0, %v539
      %v541 = vpop.f32.mrb[0].mxu0
      %542 = vmatprep.mubr.bf16.mxu0 0
      %543 = vmatmul.mubr.bf16.gmra.mrb[0].mxu0 %v423
      %v544 = vpop.f32.mrb[0].mxu0
      %v545 = vadd.f32 0.0, %v544
      %v546 = vpop.f32.mrb[0].mxu0
      %v547 = vpop.f32.mrb[0].mxu0
      %v548 = vadd.f32 0.0, %v547
      %v549 = vpop.f32.mrb[0].mxu0
      %550 = vmatprep.mubr.bf16.mxu0 0
      %551 = vmatmul.mubr.bf16.gmra.mrb[0].mxu0 %v424
      %v552 = vpop.f32.mrb[0].mxu0
      %v553 = vadd.f32 0.0, %v552
      %v554 = vpop.f32.mrb[0].mxu0
      %v555 = vpop.f32.mrb[0].mxu0
      %v556 = vadd.f32 0.0, %v555
      %v557 = vpop.f32.mrb[0].mxu0
      %558 = vmatprep.mubr.bf16.mxu0 0
      %559 = vmatmul.mubr.bf16.gmra.mrb[0].mxu0 %v425
      %v560 = vpop.f32.mrb[0].mxu0
      %v561 = vadd.f32 0.0, %v560
      %v562 = vpop.f32.mrb[0].mxu0
      %v563 = vpop.f32.mrb[0].mxu0
      %v564 = vadd.f32 0.0, %v563
      %v565 = vpop.f32.mrb[0].mxu0
      %566 = vmatprep.mubr.bf16.mxu0 0
      %567 = vmatmul.mubr.bf16.gmra.mrb[0].mxu0 %v426
      %v568 = vpop.f32.mrb[0].mxu0
      %v569 = vadd.f32 0.0, %v568
      %v570 = vpop.f32.mrb[0].mxu0
      %v571 = vpop.f32.mrb[0].mxu0
      %v572 = vadd.f32 0.0, %v571
      %v573 = vpop.f32.mrb[0].mxu0
      %574 = vmatprep.mubr.bf16.mxu0 0
      %575 = vmatmul.mubr.bf16.gmra.mrb[0].mxu0 %v427
      %v576 = vpop.f32.mrb[0].mxu0
      %v577 = vadd.f32 0.0, %v576
      %v578 = vpop.f32.mrb[0].mxu0
      %v579 = vpop.f32.mrb[0].mxu0
      %v580 = vadd.f32 0.0, %v579
      %v581 = vpop.f32.mrb[0].mxu0
      %582 = vmatprep.mubr.bf16.mxu0 0
      %583 = vmatmul.mubr.bf16.gmra.mrb[0].mxu0 %v428
      %v584 = vpop.f32.mrb[0].mxu0
      %v585 = vadd.f32 0.0, %v584
      %v586 = vpop.f32.mrb[0].mxu0
      %v587 = vpop.f32.mrb[0].mxu0
      %v588 = vadd.f32 0.0, %v587
      %v589 = vpop.f32.mrb[0].mxu0
      %590 = vmatprep.mubr.bf16.mxu0 0
      %591 = vmatmul.mubr.bf16.gmra.mrb[0].mxu0 %v429
      %v592 = vpop.f32.mrb[0].mxu0
      %v593 = vadd.f32 0.0, %v592
      %v594 = vpop.f32.mrb[0].mxu0
      %v595 = vpop.f32.mrb[0].mxu0
      %v596 = vadd.f32 0.0, %v595
      %v597 = vpop.f32.mrb[0].mxu0
      %598 = vmatprep.mubr.bf16.mxu0 0
      %599 = vmatmul.mubr.bf16.gmra.mrb[0].mxu0 %v430
      %v600 = vpop.f32.mrb[0].mxu0
      %v601 = vadd.f32 0.0, %v600
      %v602 = vpop.f32.mrb[0].mxu0
      %v603 = vpop.f32.mrb[0].mxu0
      %v604 = vadd.f32 0.0, %v603
      %v605 = vpop.f32.mrb[0].mxu0
      %606 = vmatprep.mubr.bf16.mxu0 0
      %607 = vmatmul.mubr.bf16.gmra.mrb[0].mxu0 %v431
      %v608 = vpop.f32.mrb[0].mxu0
      %v609 = vadd.f32 0.0, %v608
      %v610 = vpop.f32.mrb[0].mxu0
      %v611 = vpop.f32.mrb[0].mxu0
      %v612 = vadd.f32 0.0, %v611
      %v613 = vpop.f32.mrb[0].mxu0
      %614 = vmatprep.mubr.bf16.mxu0 0
      %615 = vmatmul.mubr.bf16.gmra.mrb[0].mxu0 %v432
      %v616 = vpop.f32.mrb[0].mxu0
      %v617 = vadd.f32 0.0, %v616
      %v618 = vpop.f32.mrb[0].mxu0
      %v619 = vpop.f32.mrb[0].mxu0
      %v620 = vadd.f32 0.0, %v619
      %v621 = vpop.f32.mrb[0].mxu0
      %622 = vmatprep.mubr.bf16.mxu0 0
      %623 = vmatmul.mubr.bf16.gmra.mrb[0].mxu0 %v433
      %v624 = vpop.f32.mrb[0].mxu0
      %v625 = vadd.f32 0.0, %v624
      %v626 = vpop.f32.mrb[0].mxu0
      %v627 = vpop.f32.mrb[0].mxu0
      %v628 = vadd.f32 0.0, %v627
      %v629 = vpop.f32.mrb[0].mxu0
      %630 = vmatprep.mubr.bf16.mxu0 0
      %631 = vmatmul.mubr.bf16.gmra.mrb[0].mxu0 %v434
      %v632 = vpop.f32.mrb[0].mxu0
      %v633 = vadd.f32 0.0, %v632
      %v634 = vpop.f32.mrb[0].mxu0
      %v635 = vpop.f32.mrb[0].mxu0
      %v636 = vadd.f32 0.0, %v635
      %v637 = vpop.f32.mrb[0].mxu0
      %638 = vmatprep.mubr.bf16.mxu0 0
      %639 = vmatmul.mubr.bf16.gmra.mrb[0].mxu0 %v435
      %v640 = vpop.f32.mrb[0].mxu0
      %v641 = vadd.f32 0.0, %v640
      %v642 = vpop.f32.mrb[0].mxu0
      %v643 = vpop.f32.mrb[0].mxu0
      %v644 = vadd.f32 0.0, %v643
      %v645 = vpop.f32.mrb[0].mxu0
      %646 = vmatprep.mubr.bf16.mxu0 0
      %647 = vmatmul.mubr.bf16.gmra.mrb[0].mxu0 %v436
      %v648 = vpop.f32.mrb[0].mxu0
      %v649 = vadd.f32 0.0, %v648
      %v650 = vpop.f32.mrb[0].mxu0
      %v651 = vpop.f32.mrb[0].mxu0
      %v652 = vadd.f32 0.0, %v651
      %v653 = vpop.f32.mrb[0].mxu0
      %654 = vmatprep.mubr.bf16.mxu0 0
      %655 = vmatmul.mubr.bf16.gmra.mrb[0].mxu0 %v437
      %v656 = vpop.f32.mrb[0].mxu0
      %v657 = vadd.f32 0.0, %v656
      %v658 = vpop.f32.mrb[0].mxu0
      %v659 = vpop.f32.mrb[0].mxu0
      %v660 = vadd.f32 0.0, %v659
      %v661 = vpop.f32.mrb[0].mxu0
      %662 = vdwg.mxu0
      %p663 = scmp.eq.s32.totalorder %s23, 0
      // Predicated region
      $region29: #{conv_block_forward.2} parent=27 // pred_check
        %p664 = pneg %p663
      $region30: #{conv_block_forward.2} parent=27 // pred_check_branch
        %666 = sbr.rel (%p664) target = $region32
      $region31: #{conv_block_forward.2} parent=27 // pred_region
        %667 = vst [vmem:[#allocation2] sm:$0xff] %v537
        %668 = vst [vmem:[#allocation2 + $0x8] sm:$0xff] %v540
        %669 = vst [vmem:[#allocation2 + $0x10] sm:$0xff] %v545
        %670 = vst [vmem:[#allocation2 + $0x18] sm:$0xff] %v548
        %671 = vst [vmem:[#allocation2 + $0x20] sm:$0xff] %v553
        %672 = vst [vmem:[#allocation2 + $0x28] sm:$0xff] %v556
        %673 = vst [vmem:[#allocation2 + $0x30] sm:$0xff] %v561
        %674 = vst [vmem:[#allocation2 + $0x38] sm:$0xff] %v564
        %675 = vst [vmem:[#allocation2 + $0x40] sm:$0xff] %v569
        %676 = vst [vmem:[#allocation2 + $0x48] sm:$0xff] %v572
        %677 = vst [vmem:[#allocation2 + $0x50] sm:$0xff] %v577
        %678 = vst [vmem:[#allocation2 + $0x58] sm:$0xff] %v580
        %679 = vst [vmem:[#allocation2 + $0x60] sm:$0xff] %v585
        %680 = vst [vmem:[#allocation2 + $0x68] sm:$0xff] %v588
        %681 = vst [vmem:[#allocation2 + $0x70] sm:$0xff] %v593
        %682 = vst [vmem:[#allocation2 + $0x78] sm:$0xff] %v596
        %683 = vst [vmem:[#allocation2 + $0x80] sm:$0xff] %v601
        %684 = vst [vmem:[#allocation2 + $0x88] sm:$0xff] %v604
        %685 = vst [vmem:[#allocation2 + $0x90] sm:$0xff] %v609
        %686 = vst [vmem:[#allocation2 + $0x98] sm:$0xff] %v612
        %687 = vst [vmem:[#allocation2 + $0xa0] sm:$0xff] %v617
        %688 = vst [vmem:[#allocation2 + $0xa8] sm:$0xff] %v620
        %689 = vst [vmem:[#allocation2 + $0xb0] sm:$0xff] %v625
        %690 = vst [vmem:[#allocation2 + $0xb8] sm:$0xff] %v628
        %691 = vst [vmem:[#allocation2 + $0xc0] sm:$0xff] %v633
        %692 = vst [vmem:[#allocation2 + $0xc8] sm:$0xff] %v636
        %693 = vst [vmem:[#allocation2 + $0xd0] sm:$0xff] %v641
        %694 = vst [vmem:[#allocation2 + $0xd8] sm:$0xff] %v644
        %695 = vst [vmem:[#allocation2 + $0xe0] sm:$0xff] %v649
        %696 = vst [vmem:[#allocation2 + $0xe8] sm:$0xff] %v652
        %697 = vst [vmem:[#allocation2 + $0xf0] sm:$0xff] %v657
        %698 = vst [vmem:[#allocation2 + $0xf8] sm:$0xff] %v660
      $region32: #{conv_block_forward.2} parent=27 // pred_fallthru
        _
      %p699 = scmp.ne.s32.totalorder %s23, 0
      // Predicated region
      $region33: #{conv_block_forward.2} parent=27 // pred_check
        %p700 = pneg %p699
      $region34: #{conv_block_forward.2} parent=27 // pred_check_branch
        %702 = sbr.rel (%p700) target = $region36
      $region35: #{conv_block_forward.2} parent=27 // pred_region
        %v703 = vld [vmem:[#allocation2] sm:$0xff]
        %v704 = vld [vmem:[#allocation2 + $0x8] sm:$0xff]
        %v705 = vld [vmem:[#allocation2 + $0x10] sm:$0xff]
        %v706 = vld [vmem:[#allocation2 + $0x18] sm:$0xff]
        %v707 = vld [vmem:[#allocation2 + $0x20] sm:$0xff]
        %v708 = vld [vmem:[#allocation2 + $0x28] sm:$0xff]
        %v709 = vld [vmem:[#allocation2 + $0x30] sm:$0xff]
        %v710 = vld [vmem:[#allocation2 + $0x38] sm:$0xff]
        %v711 = vld [vmem:[#allocation2 + $0x40] sm:$0xff]
        %v712 = vld [vmem:[#allocation2 + $0x48] sm:$0xff]
        %v713 = vld [vmem:[#allocation2 + $0x50] sm:$0xff]
        %v714 = vld [vmem:[#allocation2 + $0x58] sm:$0xff]
        %v715 = vld [vmem:[#allocation2 + $0x60] sm:$0xff]
        %v716 = vld [vmem:[#allocation2 + $0x68] sm:$0xff]
        %v717 = vld [vmem:[#allocation2 + $0x70] sm:$0xff]
        %v718 = vld [vmem:[#allocation2 + $0x78] sm:$0xff]
        %v719 = vld [vmem:[#allocation2 + $0x80] sm:$0xff]
        %v720 = vld [vmem:[#allocation2 + $0x88] sm:$0xff]
        %v721 = vld [vmem:[#allocation2 + $0x90] sm:$0xff]
        %v722 = vld [vmem:[#allocation2 + $0x98] sm:$0xff]
        %v723 = vld [vmem:[#allocation2 + $0xa0] sm:$0xff]
        %v724 = vld [vmem:[#allocation2 + $0xa8] sm:$0xff]
        %v725 = vld [vmem:[#allocation2 + $0xb0] sm:$0xff]
        %v726 = vld [vmem:[#allocation2 + $0xb8] sm:$0xff]
        %v727 = vld [vmem:[#allocation2 + $0xc0] sm:$0xff]
        %v728 = vld [vmem:[#allocation2 + $0xc8] sm:$0xff]
        %v729 = vld [vmem:[#allocation2 + $0xd0] sm:$0xff]
        %v730 = vld [vmem:[#allocation2 + $0xd8] sm:$0xff]
        %v731 = vld [vmem:[#allocation2 + $0xe0] sm:$0xff]
        %v732 = vld [vmem:[#allocation2 + $0xe8] sm:$0xff]
        %v733 = vld [vmem:[#allocation2 + $0xf0] sm:$0xff]
        %v734 = vld [vmem:[#allocation2 + $0xf8] sm:$0xff]
        %v735 = vadd.f32 %v703, %v537
        %v736 = vadd.f32 %v704, %v540
        %v737 = vadd.f32 %v705, %v545
        %v738 = vadd.f32 %v706, %v548
        %v739 = vadd.f32 %v707, %v553
        %v740 = vadd.f32 %v708, %v556
        %v741 = vadd.f32 %v709, %v561
        %v742 = vadd.f32 %v710, %v564
        %v743 = vadd.f32 %v711, %v569
        %v744 = vadd.f32 %v712, %v572
        %v745 = vadd.f32 %v713, %v577
        %v746 = vadd.f32 %v714, %v580
        %v747 = vadd.f32 %v715, %v585
        %v748 = vadd.f32 %v716, %v588
        %v749 = vadd.f32 %v717, %v593
        %v750 = vadd.f32 %v718, %v596
        %v751 = vadd.f32 %v719, %v601
        %v752 = vadd.f32 %v720, %v604
        %v753 = vadd.f32 %v721, %v609
        %v754 = vadd.f32 %v722, %v612
        %v755 = vadd.f32 %v723, %v617
        %v756 = vadd.f32 %v724, %v620
        %v757 = vadd.f32 %v725, %v625
        %v758 = vadd.f32 %v726, %v628
        %v759 = vadd.f32 %v727, %v633
        %v760 = vadd.f32 %v728, %v636
        %v761 = vadd.f32 %v729, %v641
        %v762 = vadd.f32 %v730, %v644
        %v763 = vadd.f32 %v731, %v649
        %v764 = vadd.f32 %v732, %v652
        %v765 = vadd.f32 %v733, %v657
        %v766 = vadd.f32 %v734, %v660
        %767 = vst [vmem:[#allocation2] sm:$0xff] %v735
        %768 = vst [vmem:[#allocation2 + $0x8] sm:$0xff] %v736
        %769 = vst [vmem:[#allocation2 + $0x10] sm:$0xff] %v737
        %770 = vst [vmem:[#allocation2 + $0x18] sm:$0xff] %v738
        %771 = vst [vmem:[#allocation2 + $0x20] sm:$0xff] %v739
        %772 = vst [vmem:[#allocation2 + $0x28] sm:$0xff] %v740
        %773 = vst [vmem:[#allocation2 + $0x30] sm:$0xff] %v741
        %774 = vst [vmem:[#allocation2 + $0x38] sm:$0xff] %v742
        %775 = vst [vmem:[#allocation2 + $0x40] sm:$0xff] %v743
        %776 = vst [vmem:[#allocation2 + $0x48] sm:$0xff] %v744
        %777 = vst [vmem:[#allocation2 + $0x50] sm:$0xff] %v745
        %778 = vst [vmem:[#allocation2 + $0x58] sm:$0xff] %v746
        %779 = vst [vmem:[#allocation2 + $0x60] sm:$0xff] %v747
        %780 = vst [vmem:[#allocation2 + $0x68] sm:$0xff] %v748
        %781 = vst [vmem:[#allocation2 + $0x70] sm:$0xff] %v749
        %782 = vst [vmem:[#allocation2 + $0x78] sm:$0xff] %v750
        %783 = vst [vmem:[#allocation2 + $0x80] sm:$0xff] %v751
        %784 = vst [vmem:[#allocation2 + $0x88] sm:$0xff] %v752
        %785 = vst [vmem:[#allocation2 + $0x90] sm:$0xff] %v753
        %786 = vst [vmem:[#allocation2 + $0x98] sm:$0xff] %v754
        %787 = vst [vmem:[#allocation2 + $0xa0] sm:$0xff] %v755
        %788 = vst [vmem:[#allocation2 + $0xa8] sm:$0xff] %v756
        %789 = vst [vmem:[#allocation2 + $0xb0] sm:$0xff] %v757
        %790 = vst [vmem:[#allocation2 + $0xb8] sm:$0xff] %v758
        %791 = vst [vmem:[#allocation2 + $0xc0] sm:$0xff] %v759
        %792 = vst [vmem:[#allocation2 + $0xc8] sm:$0xff] %v760
        %793 = vst [vmem:[#allocation2 + $0xd0] sm:$0xff] %v761
        %794 = vst [vmem:[#allocation2 + $0xd8] sm:$0xff] %v762
        %795 = vst [vmem:[#allocation2 + $0xe0] sm:$0xff] %v763
        %796 = vst [vmem:[#allocation2 + $0xe8] sm:$0xff] %v764
        %797 = vst [vmem:[#allocation2 + $0xf0] sm:$0xff] %v765
        %798 = vst [vmem:[#allocation2 + $0xf8] sm:$0xff] %v766
      $region36: #{conv_block_forward.2} parent=27 // pred_fallthru
        _
      // Predicated region
      $region37: #{conv_block_forward.2} parent=27 // pred_check
        %p799 = pneg %p663
      $region38: #{conv_block_forward.2} parent=27 // pred_check_branch
        %801 = sbr.rel (%p799) target = $region40
      $region39: #{conv_block_forward.2} parent=27 // pred_region
        %v802 = vld [vmem:[#allocation2] sm:$0xff]
        %v803 = vld [vmem:[#allocation2 + $0x8] sm:$0xff]
        %v804 = vld [vmem:[#allocation2 + $0x10] sm:$0xff]
        %v805 = vld [vmem:[#allocation2 + $0x18] sm:$0xff]
        %v806 = vld [vmem:[#allocation2 + $0x20] sm:$0xff]
        %v807 = vld [vmem:[#allocation2 + $0x28] sm:$0xff]
        %v808 = vld [vmem:[#allocation2 + $0x30] sm:$0xff]
        %v809 = vld [vmem:[#allocation2 + $0x38] sm:$0xff]
        %v810 = vld [vmem:[#allocation2 + $0x40] sm:$0xff]
        %v811 = vld [vmem:[#allocation2 + $0x48] sm:$0xff]
        %v812 = vld [vmem:[#allocation2 + $0x50] sm:$0xff]
        %v813 = vld [vmem:[#allocation2 + $0x58] sm:$0xff]
        %v814 = vld [vmem:[#allocation2 + $0x60] sm:$0xff]
        %v815 = vld [vmem:[#allocation2 + $0x68] sm:$0xff]
        %v816 = vld [vmem:[#allocation2 + $0x70] sm:$0xff]
        %v817 = vld [vmem:[#allocation2 + $0x78] sm:$0xff]
        %v818 = vld [vmem:[#allocation2 + $0x80] sm:$0xff]
        %v819 = vld [vmem:[#allocation2 + $0x88] sm:$0xff]
        %v820 = vld [vmem:[#allocation2 + $0x90] sm:$0xff]
        %v821 = vld [vmem:[#allocation2 + $0x98] sm:$0xff]
        %v822 = vld [vmem:[#allocation2 + $0xa0] sm:$0xff]
        %v823 = vld [vmem:[#allocation2 + $0xa8] sm:$0xff]
        %v824 = vld [vmem:[#allocation2 + $0xb0] sm:$0xff]
        %v825 = vld [vmem:[#allocation2 + $0xb8] sm:$0xff]
        %v826 = vld [vmem:[#allocation2 + $0xc0] sm:$0xff]
        %v827 = vld [vmem:[#allocation2 + $0xc8] sm:$0xff]
        %v828 = vld [vmem:[#allocation2 + $0xd0] sm:$0xff]
        %v829 = vld [vmem:[#allocation2 + $0xd8] sm:$0xff]
        %v830 = vld [vmem:[#allocation2 + $0xe0] sm:$0xff]
        %v831 = vld [vmem:[#allocation2 + $0xe8] sm:$0xff]
        %v832 = vld [vmem:[#allocation2 + $0xf0] sm:$0xff]
        %v833 = vld [vmem:[#allocation2 + $0xf8] sm:$0xff]
        %v834 = vpack.c.bf16 %v803, %v802
        %v835 = vpack.c.bf16 %v805, %v804
        %v836 = vpack.c.bf16 %v807, %v806
        %v837 = vpack.c.bf16 %v809, %v808
        %v838 = vpack.c.bf16 %v811, %v810
        %v839 = vpack.c.bf16 %v813, %v812
        %v840 = vpack.c.bf16 %v815, %v814
        %v841 = vpack.c.bf16 %v817, %v816
        %v842 = vpack.c.bf16 %v819, %v818
        %v843 = vpack.c.bf16 %v821, %v820
        %v844 = vpack.c.bf16 %v823, %v822
        %v845 = vpack.c.bf16 %v825, %v824
        %v846 = vpack.c.bf16 %v827, %v826
        %v847 = vpack.c.bf16 %v829, %v828
        %v848 = vpack.c.bf16 %v831, %v830
        %v849 = vpack.c.bf16 %v833, %v832
        %v866 = vunpack.c.l.b16 %v834
        %v867 = vunpack.c.h.b16 %v834
        %v868 = vunpack.c.l.b16 %v835
        %v869 = vunpack.c.h.b16 %v835
        %v870 = vunpack.c.l.b16 %v836
        %v871 = vunpack.c.h.b16 %v836
        %v872 = vunpack.c.l.b16 %v837
        %v873 = vunpack.c.h.b16 %v837
        %v874 = vunpack.c.l.b16 %v838
        %v875 = vunpack.c.h.b16 %v838
        %v876 = vunpack.c.l.b16 %v839
        %v877 = vunpack.c.h.b16 %v839
        %v878 = vunpack.c.l.b16 %v840
        %v879 = vunpack.c.h.b16 %v840
        %v880 = vunpack.c.l.b16 %v841
        %v881 = vunpack.c.h.b16 %v841
        %v882 = vunpack.c.l.b16 %v842
        %v883 = vunpack.c.h.b16 %v842
        %v884 = vunpack.c.l.b16 %v843
        %v885 = vunpack.c.h.b16 %v843
        %v886 = vunpack.c.l.b16 %v844
        %v887 = vunpack.c.h.b16 %v844
        %v888 = vunpack.c.l.b16 %v845
        %v889 = vunpack.c.h.b16 %v845
        %v890 = vunpack.c.l.b16 %v846
        %v891 = vunpack.c.h.b16 %v846
        %v892 = vunpack.c.l.b16 %v847
        %v893 = vunpack.c.h.b16 %v847
        %v894 = vunpack.c.l.b16 %v848
        %v895 = vunpack.c.h.b16 %v848
        %v896 = vunpack.c.l.b16 %v849
        %v897 = vunpack.c.h.b16 %v849
        %v898 = vpack.c.b16 %v866, %v866
        %v899 = vpack.c.b16 %v867, %v867
        %v900 = vpack.c.b16 %v868, %v868
        %v901 = vpack.c.b16 %v869, %v869
        %v902 = vpack.c.b16 %v870, %v870
        %v903 = vpack.c.b16 %v871, %v871
        %v904 = vpack.c.b16 %v872, %v872
        %v905 = vpack.c.b16 %v873, %v873
        %v906 = vpack.c.b16 %v874, %v874
        %v907 = vpack.c.b16 %v875, %v875
        %v908 = vpack.c.b16 %v876, %v876
        %v909 = vpack.c.b16 %v877, %v877
        %v910 = vpack.c.b16 %v878, %v878
        %v911 = vpack.c.b16 %v879, %v879
        %v912 = vpack.c.b16 %v880, %v880
        %v913 = vpack.c.b16 %v881, %v881
        %v914 = vpack.c.b16 %v882, %v882
        %v915 = vpack.c.b16 %v883, %v883
        %v916 = vpack.c.b16 %v884, %v884
        %v917 = vpack.c.b16 %v885, %v885
        %v918 = vpack.c.b16 %v886, %v886
        %v919 = vpack.c.b16 %v887, %v887
        %v920 = vpack.c.b16 %v888, %v888
        %v921 = vpack.c.b16 %v889, %v889
        %v922 = vpack.c.b16 %v890, %v890
        %v923 = vpack.c.b16 %v891, %v891
        %v924 = vpack.c.b16 %v892, %v892
        %v925 = vpack.c.b16 %v893, %v893
        %v926 = vpack.c.b16 %v894, %v894
        %v927 = vpack.c.b16 %v895, %v895
        %v928 = vpack.c.b16 %v896, %v896
        %v929 = vpack.c.b16 %v897, %v897
        %962 = vst [vmem:[%s293] sm:$0xf] %v898
        %963 = vst [vmem:[%s293 + $0x4] sm:$0xf] %v899
        %964 = vst [vmem:[%s293 + $0x8] sm:$0xf] %v900
        %965 = vst [vmem:[%s293 + $0xc] sm:$0xf] %v901
        %966 = vst [vmem:[%s293 + $0x10] sm:$0xf] %v902
        %967 = vst [vmem:[%s293 + $0x14] sm:$0xf] %v903
        %968 = vst [vmem:[%s293 + $0x18] sm:$0xf] %v904
        %969 = vst [vmem:[%s293 + $0x1c] sm:$0xf] %v905
        %970 = vst [vmem:[%s293 + $0x20] sm:$0xf] %v906
        %971 = vst [vmem:[%s293 + $0x24] sm:$0xf] %v907
        %972 = vst [vmem:[%s293 + $0x28] sm:$0xf] %v908
        %973 = vst [vmem:[%s293 + $0x2c] sm:$0xf] %v909
        %974 = vst [vmem:[%s293 + $0x30] sm:$0xf] %v910
        %975 = vst [vmem:[%s293 + $0x34] sm:$0xf] %v911
        %976 = vst [vmem:[%s293 + $0x38] sm:$0xf] %v912
        %977 = vst [vmem:[%s293 + $0x3c] sm:$0xf] %v913
        %978 = vst [vmem:[%s293 + $0x40] sm:$0xf] %v914
        %979 = vst [vmem:[%s293 + $0x44] sm:$0xf] %v915
        %980 = vst [vmem:[%s293 + $0x48] sm:$0xf] %v916
        %981 = vst [vmem:[%s293 + $0x4c] sm:$0xf] %v917
        %982 = vst [vmem:[%s293 + $0x50] sm:$0xf] %v918
        %983 = vst [vmem:[%s293 + $0x54] sm:$0xf] %v919
        %984 = vst [vmem:[%s293 + $0x58] sm:$0xf] %v920
        %985 = vst [vmem:[%s293 + $0x5c] sm:$0xf] %v921
        %986 = vst [vmem:[%s293 + $0x60] sm:$0xf] %v922
        %987 = vst [vmem:[%s293 + $0x64] sm:$0xf] %v923
        %988 = vst [vmem:[%s293 + $0x68] sm:$0xf] %v924
        %989 = vst [vmem:[%s293 + $0x6c] sm:$0xf] %v925
        %990 = vst [vmem:[%s293 + $0x70] sm:$0xf] %v926
        %991 = vst [vmem:[%s293 + $0x74] sm:$0xf] %v927
        %992 = vst [vmem:[%s293 + $0x78] sm:$0xf] %v928
        %993 = vst [vmem:[%s293 + $0x7c] sm:$0xf] %v929
        %v994 = vadd.f32 %v802, %v803
        %v995 = vadd.f32 %v994, %v804
        %v996 = vadd.f32 %v995, %v805
        %v997 = vadd.f32 %v996, %v806
        %v998 = vadd.f32 %v997, %v807
        %v999 = vadd.f32 %v998, %v808
        %v1000 = vadd.f32 %v999, %v809
        %v1001 = vadd.f32 %v1000, %v810
        %v1002 = vadd.f32 %v1001, %v811
        %v1003 = vadd.f32 %v1002, %v812
        %v1004 = vadd.f32 %v1003, %v813
        %v1005 = vadd.f32 %v1004, %v814
        %v1006 = vadd.f32 %v1005, %v815
        %v1007 = vadd.f32 %v1006, %v816
        %v1008 = vadd.f32 %v1007, %v817
        %v1009 = vadd.f32 %v1008, %v818
        %v1010 = vadd.f32 %v1009, %v819
        %v1011 = vadd.f32 %v1010, %v820
        %v1012 = vadd.f32 %v1011, %v821
        %v1013 = vadd.f32 %v1012, %v822
        %v1014 = vadd.f32 %v1013, %v823
        %v1015 = vadd.f32 %v1014, %v824
        %v1016 = vadd.f32 %v1015, %v825
        %v1017 = vadd.f32 %v1016, %v826
        %v1018 = vadd.f32 %v1017, %v827
        %v1019 = vadd.f32 %v1018, %v828
        %v1020 = vadd.f32 %v1019, %v829
        %v1021 = vadd.f32 %v1020, %v830
        %v1022 = vadd.f32 %v1021, %v831
        %v1023 = vadd.f32 %v1022, %v832
        %v1024 = vadd.f32 %v1023, %v833
        %1025 = vst [vmem:[%s301] sm:$0xff] %v1024
        %v1026 = vmul.f32 %v802, %v802
        %v1027 = vmul.f32 %v803, %v803
        %v1028 = vmul.f32 %v804, %v804
        %v1029 = vmul.f32 %v805, %v805
        %v1030 = vmul.f32 %v806, %v806
        %v1031 = vmul.f32 %v807, %v807
        %v1032 = vmul.f32 %v808, %v808
        %v1033 = vmul.f32 %v809, %v809
        %v1034 = vmul.f32 %v810, %v810
        %v1035 = vmul.f32 %v811, %v811
        %v1036 = vmul.f32 %v812, %v812
        %v1037 = vmul.f32 %v813, %v813
        %v1038 = vmul.f32 %v814, %v814
        %v1039 = vmul.f32 %v815, %v815
        %v1040 = vmul.f32 %v816, %v816
        %v1041 = vmul.f32 %v817, %v817
        %v1042 = vmul.f32 %v818, %v818
        %v1043 = vmul.f32 %v819, %v819
        %v1044 = vmul.f32 %v820, %v820
        %v1045 = vmul.f32 %v821, %v821
        %v1046 = vmul.f32 %v822, %v822
        %v1047 = vmul.f32 %v823, %v823
        %v1048 = vmul.f32 %v824, %v824
        %v1049 = vmul.f32 %v825, %v825
        %v1050 = vmul.f32 %v826, %v826
        %v1051 = vmul.f32 %v827, %v827
        %v1052 = vmul.f32 %v828, %v828
        %v1053 = vmul.f32 %v829, %v829
        %v1054 = vmul.f32 %v830, %v830
        %v1055 = vmul.f32 %v831, %v831
        %v1056 = vmul.f32 %v832, %v832
        %v1057 = vmul.f32 %v833, %v833
        %v1058 = vadd.f32 %v1026, %v1027
        %v1059 = vadd.f32 %v1058, %v1028
        %v1060 = vadd.f32 %v1059, %v1029
        %v1061 = vadd.f32 %v1060, %v1030
        %v1062 = vadd.f32 %v1061, %v1031
        %v1063 = vadd.f32 %v1062, %v1032
        %v1064 = vadd.f32 %v1063, %v1033
        %v1065 = vadd.f32 %v1064, %v1034
        %v1066 = vadd.f32 %v1065, %v1035
        %v1067 = vadd.f32 %v1066, %v1036
        %v1068 = vadd.f32 %v1067, %v1037
        %v1069 = vadd.f32 %v1068, %v1038
        %v1070 = vadd.f32 %v1069, %v1039
        %v1071 = vadd.f32 %v1070, %v1040
        %v1072 = vadd.f32 %v1071, %v1041
        %v1073 = vadd.f32 %v1072, %v1042
        %v1074 = vadd.f32 %v1073, %v1043
        %v1075 = vadd.f32 %v1074, %v1044
        %v1076 = vadd.f32 %v1075, %v1045
        %v1077 = vadd.f32 %v1076, %v1046
        %v1078 = vadd.f32 %v1077, %v1047
        %v1079 = vadd.f32 %v1078, %v1048
        %v1080 = vadd.f32 %v1079, %v1049
        %v1081 = vadd.f32 %v1080, %v1050
        %v1082 = vadd.f32 %v1081, %v1051
        %v1083 = vadd.f32 %v1082, %v1052
        %v1084 = vadd.f32 %v1083, %v1053
        %v1085 = vadd.f32 %v1084, %v1054
        %v1086 = vadd.f32 %v1085, %v1055
        %v1087 = vadd.f32 %v1086, %v1056
        %v1088 = vadd.f32 %v1087, %v1057
        %1089 = vst [vmem:[%s308] sm:$0xff] %v1088
      $region40: #{conv_block_forward.2} parent=27 // pred_fallthru
        _
      %s1090 = smul.u32 32, %s21
      %p1091 = scmp.lt.s32.totalorder %s1090, 63
      %s1092 = scalar_select %p1091, %s1090, 63
      %p1093 = scmp.lt.s32.totalorder %s22, 0
      %s1094 = scalar_select %p1093, %s22, 0
      %s1095 = sadd.s32 %s1094, %s1092
      %s1096 = smul.addr %s1095, 4
      %s1097 = scalar_lea.vmem %s2, %s1096
      %p1098 = scmp.lt.s32.totalorder %s21, 1
      %s1099 = scalar_select %p1098, %s21, 1
      %p1100 = scmp.lt.s32.totalorder %s22, 0
      %s1101 = scalar_select %p1100, %s22, 0
      %s1102 = sadd.s32 %s1101, %s1099
      %s1103 = smul.addr %s1102, 8
      %s1104 = scalar_lea.vmem %s3, %s1103
      %p1105 = scmp.lt.s32.totalorder %s21, 1
      %s1106 = scalar_select %p1105, %s21, 1
      %p1107 = scmp.lt.s32.totalorder %s22, 0
      %s1108 = scalar_select %p1107, %s22, 0
      %s1109 = sadd.s32 %s1108, %s1106
      %s1110 = smul.addr %s1109, 8
      %s1111 = scalar_lea.vmem %s4, %s1110
      // Predicated region
      $region41: #{conv_block_forward.2} parent=27 // pred_check
        %p1112 = pneg %p111
      $region42: #{conv_block_forward.2} parent=27 // pred_check_branch
        %1114 = sbr.rel (%p1112) target = $region44
      $region43: #{conv_block_forward.2} parent=27 // pred_region
        %s1115 = smul.u32 32, %s21
      $region44: #{conv_block_forward.2} parent=27 // pred_fallthru
        _
      // Predicated region
      $region45: #{conv_block_forward.2} parent=27 // pred_check
        %p1116 = pneg %p139
      $region46: #{conv_block_forward.2} parent=27 // pred_check_branch
        %1118 = sbr.rel (%p1116) target = $region48
      $region47: #{conv_block_forward.2} parent=27 // pred_region
        _
      $region48: #{conv_block_forward.2} parent=27 // pred_fallthru
        _
      // Predicated region
      $region49: #{conv_block_forward.2} parent=27 // pred_check
        %p1119 = pneg %p167
      $region50: #{conv_block_forward.2} parent=27 // pred_check_branch
        %1121 = sbr.rel (%p1119) target = $region52
      $region51: #{conv_block_forward.2} parent=27 // pred_region
        _
      $region52: #{conv_block_forward.2} parent=27 // pred_fallthru
        _
    $region28: #{conv_block_forward.2} parent=5 // pred_fallthru
      _
    %p1122 = scmp.le.s32.totalorder 2, %s11
    // Predicated region
    $region53: #{conv_block_forward.2} parent=5 // pred_check
      %p1123 = pneg %p1122
    $region54: #{conv_block_forward.2} parent=5 // pred_check_branch
      %1125 = sbr.rel (%p1123) target = $region56
    $region55: #{conv_block_forward.2} parent=5 // pred_region
      %s1126 = ssub.s32 %s11, 2
      // Predicated region
      $region57: #{conv_block_forward.2} parent=55 // pred_check
        %p1127 = pneg %p117
      $region58: #{conv_block_forward.2} parent=55 // pred_check_branch
        %1129 = sbr.rel (%p1127) target = $region60
      $region59: #{conv_block_forward.2} parent=55 // pred_region
        %s1130 = smul.u32 32, %s24
        %p1131 = scmp.lt.s32.totalorder %s1130, 63
        %s1132 = scalar_select %p1131, %s1130, 63
        %p1133 = scmp.lt.s32.totalorder %s25, 0
        %s1134 = scalar_select %p1133, %s25, 0
        %s1135 = sadd.s32 %s1134, %s1132
        %s1136 = smul.addr %s1135, 4
        %s1137 = scalar_lea.vmem %s2, %s1136
      $region60: #{conv_block_forward.2} parent=55 // pred_fallthru
        _
      // Predicated region
      $region61: #{conv_block_forward.2} parent=55 // pred_check
        %p1138 = pneg %p145
      $region62: #{conv_block_forward.2} parent=55 // pred_check_branch
        %1140 = sbr.rel (%p1138) target = $region64
      $region63: #{conv_block_forward.2} parent=55 // pred_region
        %p1141 = scmp.lt.s32.totalorder %s24, 1
        %s1142 = scalar_select %p1141, %s24, 1
        %p1143 = scmp.lt.s32.totalorder %s25, 0
        %s1144 = scalar_select %p1143, %s25, 0
        %s1145 = sadd.s32 %s1144, %s1142
        %s1146 = smul.addr %s1145, 8
        %s1147 = scalar_lea.vmem %s3, %s1146
      $region64: #{conv_block_forward.2} parent=55 // pred_fallthru
        _
      // Predicated region
      $region65: #{conv_block_forward.2} parent=55 // pred_check
        %p1148 = pneg %p173
      $region66: #{conv_block_forward.2} parent=55 // pred_check_branch
        %1150 = sbr.rel (%p1148) target = $region68
      $region67: #{conv_block_forward.2} parent=55 // pred_region
        %p1151 = scmp.lt.s32.totalorder %s24, 1
        %s1152 = scalar_select %p1151, %s24, 1
        %p1153 = scmp.lt.s32.totalorder %s25, 0
        %s1154 = scalar_select %p1153, %s25, 0
        %s1155 = sadd.s32 %s1154, %s1152
        %s1156 = smul.addr %s1155, 8
        %s1157 = scalar_lea.vmem %s4, %s1156
      $region68: #{conv_block_forward.2} parent=55 // pred_fallthru
        _
    $region56: #{conv_block_forward.2} parent=5 // pred_fallthru
      _
  $region6: #{conv_block_forward.2} parent=0 // loop_footer
    %s15 = sadd.s32 1, %s11
  $region7: #{conv_block_forward.2} parent=0 // loop_footer_branch
    %10 = sbr.rel target = $region3
  $region8: #{conv_block_forward.2} parent=0 // loop_exit
    _

</llo_original>
